<compile_context>
chip_gen: v6e
topology: v6e:2x2x1
jax: 0.10.0
libtpu: 0.0.40
codegen_flags: <defaults>
</compile_context>

<pallas_src>
import numpy as np
import jax
import jax.numpy as jnp
from jax.experimental import pallas as pl
from jax.experimental.pallas import tpu as pltpu


# ---------------------------------------------------------------------------
# Normalization statistics (exactly from the PyTorch module, 69 channels)
# ---------------------------------------------------------------------------
MEAN = np.array([276.707305, -0.102550652, -0.0824716593, 101068.682, 213.901834,
                 209.669021, 214.224057, 218.012186, 222.11796, 227.61818,
                 240.553091, 251.450718, 259.819244, 266.263193, 273.431732,
                 276.170563, 279.528167, 3.87254235, 9.39696721, 13.980976,
                 14.958866, 14.2096134, 12.6746424, 9.40749201, 6.76743938,
                 4.8505783, 3.21840022, 1.19613039, 0.340955153, -0.200982027,
                 0.134509794, 0.0186537438, 0.177366811, 0.260285472, 0.108158604,
                 0.0213348037, -0.0533151006, -0.0112940699, 0.0137653121,
                 0.0164470187, -0.00536961093, -0.0142718665, -0.081630683,
                 199295.885, 157330.177, 132683.094, 114840.669, 100754.974,
                 88996.2866, 69685.5338, 53921.2137, 40529.7225, 28868.4465,
                 13761.9912, 7060.23469, 815.529195, 2.87899168e-06, 2.44946302e-06,
                 4.41716612e-06, 1.54408574e-05, 4.63313069e-05, 0.000105735979,
                 0.000332204274, 0.000738973747, 0.0013736558, 0.0022092903,
                 0.00423163159, 0.0055933354, 0.00648287372], dtype=np.float32)

STD = np.array([20.9942404, 5.25000636, 4.54455487, 1309.60034, 8.97812032,
                13.2565826, 8.31339312, 5.15994231, 6.88576031, 9.9320345,
                12.435249, 12.9195538, 13.0728671, 14.0098769, 14.7487644,
                15.3852921, 17.111693, 10.0916061, 11.8567912, 15.1044572,
                17.0482496, 17.2106285, 16.4754925, 13.9160706, 11.7258202,
                10.0555255, 8.94536813, 7.8040239, 7.49754381, 5.91365735,
                7.13226032, 7.68995984, 9.47791003, 11.5089522, 12.7980862,
                12.7539256, 10.8107437, 8.95480061, 7.69034815, 6.9197437,
                6.33759832, 6.47175201, 5.22074238, 2977.59049, 3990.86247,
                4975.00846, 5286.10563, 5157.72933, 4777.62842, 3875.01782,
                3091.97738, 2450.88338, 1919.40426, 1307.57654, 1108.89327,
                1015.93943, 1.87661911e-07, 4.75091686e-07, 2.64407777e-06,
                1.75901199e-05, 6.03882715e-05, 0.000142577167, 0.000454680063,
                0.000975985021, 0.00164347251, 0.00237802664, 0.00398016829,
                0.00498595989, 0.0058028074], dtype=np.float32)

MEAN_J = jnp.asarray(MEAN)
STD_J = jnp.asarray(STD)

NUM_CH = 69       # physical variables
PATCH = 4         # encoder/decoder spatial down/up-sampling factor
LATENT_C = 4      # latent channels; moments = 2*LATENT_C (mean + logvar)
MC = 2 * LATENT_C
KENC = PATCH * PATCH * NUM_CH     # 1104: patchified feature width


# ---------------------------------------------------------------------------
# Fused kernel: encode(x1), encode(x2) -> forecast loop -> sample -> decode
# All per-row work on a (TM, KENC) tile; weights stay resident in VMEM.
# ---------------------------------------------------------------------------
def _make_fused_kernel(forecast_steps):
    def kernel(p1_ref, p2_ref, noise_ref,
               ew_ref, eb_ref, pwa_ref, pwb_ref, pb_ref, dw_ref, db_ref,
               o_ref):
        ew = ew_ref[...]                      # (KENC, MC) bf16
        eb = eb_ref[...]                      # (1, MC)    f32
        # fused normalize + encoder + quant_conv (bf16 operands, f32 accumulate)
        ma = jnp.dot(p1_ref[...], ew, preferred_element_type=jnp.float32) + eb
        mb = jnp.dot(p2_ref[...], ew, preferred_element_type=jnp.float32) + eb

        # resident forecast loop: moments = [ma | mb]; pred_w split host-side
        # so no lane-axis concat is ever needed.
        pwa = pwa_ref[...]                    # (MC, MC) f32
        pwb = pwb_ref[...]                    # (MC, MC) f32
        pb = pb_ref[...]                      # (1, MC)  f32
        pred = mb
        for _ in range(forecast_steps):
            pred = (jnp.dot(ma, pwa, preferred_element_type=jnp.float32)
                    + jnp.dot(mb, pwb, preferred_element_type=jnp.float32) + pb)
            ma = mb
            mb = pred

        # DiagonalGaussianDistribution(pred).sample()
        mean = pred[:, :LATENT_C]
        logvar = pred[:, LATENT_C:]
        std = jnp.exp(0.5 * jnp.clip(logvar, -30.0, 20.0))
        z = mean + std * noise_ref[...]

        # fused post_quant + decoder + denormalize
        o_ref[...] = (jnp.dot(z, dw_ref[...], preferred_element_type=jnp.float32)
                      + db_ref[...]).astype(o_ref.dtype)
    return kernel


def _rows_spec(tm, n):
    return pl.BlockSpec((tm, n), lambda i: (i, 0))


def _whole_spec(shape):
    return pl.BlockSpec(shape, lambda i: (0, 0))


def fused_encode_forecast_decode(p1, p2, noise, fp, forecast_steps):
    """p1,p2: (M, KENC) bf16 patchified raw inputs; noise: (M, LATENT_C) f32.
    Returns (M, KENC) f32 denormalized output patches."""
    Mlat, kenc = p1.shape
    assert kenc == KENC

    # Tile the pixel axis. 1024 rows -> ~2.3 MB bf16 / 4.5 MB f32 per buffer;
    # double-buffered in+out stays well under 32 MiB (safe on v7x's 64 MiB VMEM).
    TM = 1024
    if Mlat < TM:
        TM = max(8, ((Mlat + 7) // 8) * 8)
    Mpad = ((Mlat + TM - 1) // TM) * TM
    if Mpad != Mlat:
        pad = ((0, Mpad - Mlat), (0, 0))
        p1 = jnp.pad(p1, pad)
        p2 = jnp.pad(p2, pad)
        noise = jnp.pad(noise, pad)

    out = pl.pallas_call(
        _make_fused_kernel(forecast_steps),
        out_shape=jax.ShapeDtypeStruct((Mpad, KENC), jnp.float32),
        grid=(Mpad // TM,),
        in_specs=[
            _rows_spec(TM, KENC),               # p1
            _rows_spec(TM, KENC),               # p2
            _rows_spec(TM, LATENT_C),           # noise
            _whole_spec(fp["enc_w"].shape),     # (KENC, MC)
            _whole_spec(fp["enc_b"].shape),     # (1, MC)
            _whole_spec(fp["pred_w_a"].shape),  # (MC, MC)
            _whole_spec(fp["pred_w_b"].shape),  # (MC, MC)
            _whole_spec(fp["pred_b"].shape),    # (1, MC)
            _whole_spec(fp["dec_w"].shape),     # (LATENT_C, KENC)
            _whole_spec(fp["dec_b"].shape),     # (1, KENC)
        ],
        out_specs=_rows_spec(TM, KENC),
        compiler_params=pltpu.CompilerParams(
            dimension_semantics=("parallel",),
            vmem_limit_bytes=48 * 1024 * 1024,
        ),
    )(p1, p2, noise, fp["enc_w"], fp["enc_b"], fp["pred_w_a"], fp["pred_w_b"],
      fp["pred_b"], fp["dec_w"], fp["dec_b"])
    return out[:Mlat]


# ---------------------------------------------------------------------------
# Layout helpers (host-side XLA reshapes/transposes)
# TODO(synk): patchify/unpatchify could be folded into the kernel via spatial
# BlockSpecs to save two more HBM passes of the full-resolution activation.
# ---------------------------------------------------------------------------
def patchify(x_nhwc, p):
    B, H, W, C = x_nhwc.shape
    x = x_nhwc.reshape(B, H // p, p, W // p, p, C)
    x = jnp.transpose(x, (0, 1, 3, 2, 4, 5))
    return x.reshape(B * (H // p) * (W // p), p * p * C)


def unpatchify(y2d, B, h, w, p, C):
    y = y2d.reshape(B, h, w, p, p, C)
    y = jnp.transpose(y, (0, 1, 3, 2, 4, 5))
    return y.reshape(B, h * p, w * p, C)


# ---------------------------------------------------------------------------
# Deterministic synthetic parameters (the module loads checkpoints; here the
# weights are generated in-script) + offline folding of the linear chain.
# ---------------------------------------------------------------------------
def make_params():
    key = jax.random.PRNGKey(42)
    ks = jax.random.split(key, 8)

    enc_w = (jax.random.normal(ks[0], (KENC, MC)) * 0.02).astype(jnp.float32)
    enc_b = jnp.zeros((MC,), jnp.float32)
    quant_w = (jax.random.normal(ks[1], (MC, MC)) * 0.2).astype(jnp.float32)
    quant_b = jnp.zeros((MC,), jnp.float32)
    pred_w = (jax.random.normal(ks[2], (2 * MC, MC)) * 0.2).astype(jnp.float32)
    pred_b = jnp.zeros((MC,), jnp.float32)
    pq_w = (jax.random.normal(ks[3], (LATENT_C, LATENT_C)) * 0.2).astype(jnp.float32)
    pq_b = jnp.zeros((LATENT_C,), jnp.float32)
    dec_w = (jax.random.normal(ks[4], (LATENT_C, KENC)) * 0.02).astype(jnp.float32)
    dec_b = jnp.zeros((KENC,), jnp.float32)

    # Fold (normalize -> encoder -> quant_conv) into one matmul.
    # Patch layout is (p_row, p_col, channel) with channel fastest, so the
    # per-channel stats tile across the P*P positions.
    scale_rep = jnp.tile(1.0 / STD_J, PATCH * PATCH)       # (KENC,)
    shift_rep = jnp.tile(-MEAN_J / STD_J, PATCH * PATCH)
    enc_w_n = scale_rep[:, None] * enc_w
    enc_b_n = shift_rep @ enc_w + enc_b
    enc_w_f = enc_w_n @ quant_w
    enc_b_f = enc_b_n @ quant_w + quant_b

    # Fold (post_quant -> decoder -> denormalize) into one matmul.
    std_rep = jnp.tile(STD_J, PATCH * PATCH)
    mean_rep = jnp.tile(MEAN_J, PATCH * PATCH)
    dec_w_c = pq_w @ dec_w
    dec_b_c = pq_b @ dec_w + dec_b
    dec_w_f = dec_w_c * std_rep[None, :]
    dec_b_f = dec_b_c * std_rep + mean_rep

    return dict(
        enc_w=enc_w_f.astype(jnp.bfloat16),                 # (KENC, MC)
        enc_b=enc_b_f.reshape(1, MC).astype(jnp.float32),
        pred_w_a=pred_w[:MC].astype(jnp.float32),            # (MC, MC)
        pred_w_b=pred_w[MC:].astype(jnp.float32),            # (MC, MC)
        pred_b=pred_b.reshape(1, MC).astype(jnp.float32),
        dec_w=dec_w_f.astype(jnp.float32),                   # (LATENT_C, KENC)
        dec_b=dec_b_f.reshape(1, KENC).astype(jnp.float32),
    )


# ---------------------------------------------------------------------------
# Forward pass mirroring LatentUmbrellaNet.forward
# ---------------------------------------------------------------------------
def latent_umbrella_forward(x_1, x_2, params, forecast_steps=1, noise_key=None):
    assert forecast_steps >= 1
    # special-case crop from the PyTorch forward
    if x_1.shape == (1, NUM_CH, 1440, 721):
        x_1 = x_1[:, :, :, :-1]
        x_2 = x_2[:, :, :, :-1]

    B, C, H, W = x_1.shape
    assert C == NUM_CH and H % PATCH == 0 and W % PATCH == 0
    h, w = H // PATCH, W // PATCH
    Mlat = B * h * w

    # NCHW -> NHWC -> patches; bf16 carries the torch.autocast(fp16) region.
    p1 = patchify(jnp.transpose(x_1.astype(jnp.float32), (0, 2, 3, 1)),
                  PATCH).astype(jnp.bfloat16)
    p2 = patchify(jnp.transpose(x_2.astype(jnp.float32), (0, 2, 3, 1)),
                  PATCH).astype(jnp.bfloat16)

    # TODO(synk): noise could be drawn in-kernel with pltpu.prng_seed/
    # stateful_normal; kept host-side (it is only Mlat*4 floats) so the
    # pure-JAX reference check below is bit-identical in its inputs.
    if noise_key is None:
        noise_key = jax.random.PRNGKey(7)
    noise = jax.random.normal(noise_key, (Mlat, LATENT_C), dtype=jnp.float32)

    out_patches = fused_encode_forecast_decode(p1, p2, noise, params,
                                               forecast_steps)
    out_nhwc = unpatchify(out_patches, B, h, w, PATCH, NUM_CH)
    return jnp.transpose(out_nhwc, (0, 3, 1, 2))            # NCHW float32


# ---------------------------------------------------------------------------
# Pure-JAX reference (same folded weights / same precision) for validation
# ---------------------------------------------------------------------------
def _reference_patches(p1, p2, noise, fp, forecast_steps):
    ew, eb = fp["enc_w"], fp["enc_b"]
    ma = jnp.dot(p1, ew, preferred_element_type=jnp.float32) + eb
    mb = jnp.dot(p2, ew, preferred_element_type=jnp.float32) + eb
    pred = mb
    for _ in range(forecast_steps):
        pred = (jnp.dot(ma, fp["pred_w_a"]) + jnp.dot(mb, fp["pred_w_b"])
                + fp["pred_b"])
        ma, mb = mb, pred
    mean = pred[:, :LATENT_C]
    logvar = pred[:, LATENT_C:]
    z = mean + jnp.exp(0.5 * jnp.clip(logvar, -30.0, 20.0)) * noise
    return jnp.dot(z, fp["dec_w"]) + fp["dec_b"]


# ---------------------------------------------------------------------------
if __name__ == "__main__":
    key = jax.random.PRNGKey(0)
    k1, k2 = jax.random.split(key)
    B, C, H, W = 2, NUM_CH, 16, 16
    FORECAST_STEPS = 2

    # inputs roughly in the physical units implied by MEAN/STD
    x_1 = MEAN_J[None, :, None, None] + STD_J[None, :, None, None] * \
        jax.random.normal(k1, (B, C, H, W), dtype=jnp.float32)
    x_2 = MEAN_J[None, :, None, None] + STD_J[None, :, None, None] * \
        jax.random.normal(k2, (B, C, H, W), dtype=jnp.float32)

    params = make_params()
    out = latent_umbrella_forward(x_1, x_2, params,
                                  forecast_steps=FORECAST_STEPS,
                                  noise_key=jax.random.PRNGKey(7))
    out = jax.block_until_ready(out)
    assert out.shape == (B, C, H, W), out.shape
    assert out.dtype == jnp.float32
    assert bool(jnp.all(jnp.isfinite(out)))

    # correctness vs. pure-JAX reference with identical folded weights
    h, w = H // PATCH, W // PATCH
    p1 = patchify(jnp.transpose(x_1, (0, 2, 3, 1)), PATCH).astype(jnp.bfloat16)
    p2 = patchify(jnp.transpose(x_2, (0, 2, 3, 1)), PATCH).astype(jnp.bfloat16)
    noise = jax.random.normal(jax.random.PRNGKey(7), (B * h * w, LATENT_C),
                              dtype=jnp.float32)
    ref_patches = _reference_patches(p1, p2, noise, params, FORECAST_STEPS)
    ref = jnp.transpose(unpatchify(ref_patches, B, h, w, PATCH, NUM_CH),
                        (0, 3, 1, 2))
    rel_err = jnp.max(jnp.abs(out - ref) /
                      (jnp.abs(ref) + STD_J[None, :, None, None]))
    assert float(rel_err) < 1e-2, float(rel_err)

    print("KERNEL_OK")
</pallas_src>

<mosaic_0001>
module attributes {stable_mosaic.version = 11 : i64} {
  func.func @kernel(%arg0: i32, %arg1: memref<32x1104xbf16, #tpu.memory_space<vmem>>, %arg2: memref<32x1104xbf16, #tpu.memory_space<vmem>>, %arg3: memref<32x4xf32, #tpu.memory_space<vmem>>, %arg4: memref<1104x8xbf16, #tpu.memory_space<vmem>>, %arg5: memref<1x8xf32, #tpu.memory_space<vmem>>, %arg6: memref<8x8xf32, #tpu.memory_space<vmem>>, %arg7: memref<8x8xf32, #tpu.memory_space<vmem>>, %arg8: memref<1x8xf32, #tpu.memory_space<vmem>>, %arg9: memref<4x1104xf32, #tpu.memory_space<vmem>>, %arg10: memref<1x1104xf32, #tpu.memory_space<vmem>>, %arg11: memref<32x1104xf32, #tpu.memory_space<vmem>>) attributes {dimension_semantics = [#tpu.dimension_semantics<parallel>], iteration_bounds = array<i64: 1>, scalar_prefetch = 0 : i64, scratch_operands = 0 : i64, tpu.core_type = #tpu.core_type<tc>, window_params = [{transform_indices = @transform_0, window_bounds = array<i64: 32, 1104>}, {transform_indices = @transform_1, window_bounds = array<i64: 32, 1104>}, {transform_indices = @transform_2, window_bounds = array<i64: 32, 4>}, {pipeline_mode = #tpu.pipeline_mode<synchronous>, transform_indices = @transform_3, window_bounds = array<i64: 1104, 8>}, {pipeline_mode = #tpu.pipeline_mode<synchronous>, transform_indices = @transform_4, window_bounds = array<i64: 1, 8>}, {pipeline_mode = #tpu.pipeline_mode<synchronous>, transform_indices = @transform_5, window_bounds = array<i64: 8, 8>}, {pipeline_mode = #tpu.pipeline_mode<synchronous>, transform_indices = @transform_6, window_bounds = array<i64: 8, 8>}, {pipeline_mode = #tpu.pipeline_mode<synchronous>, transform_indices = @transform_7, window_bounds = array<i64: 1, 8>}, {pipeline_mode = #tpu.pipeline_mode<synchronous>, transform_indices = @transform_8, window_bounds = array<i64: 4, 1104>}, {pipeline_mode = #tpu.pipeline_mode<synchronous>, transform_indices = @transform_9, window_bounds = array<i64: 1, 1104>}, {transform_indices = @transform_10, window_bounds = array<i64: 32, 1104>}]} {
    %c0 = arith.constant 0 : index
    %c0_0 = arith.constant 0 : index
    %0 = vector.load %arg4[%c0, %c0_0] : memref<1104x8xbf16, #tpu.memory_space<vmem>>, vector<1104x8xbf16>
    %c0_1 = arith.constant 0 : index
    %c0_2 = arith.constant 0 : index
    %1 = vector.load %arg5[%c0_1, %c0_2] : memref<1x8xf32, #tpu.memory_space<vmem>>, vector<1x8xf32>
    %c0_3 = arith.constant 0 : index
    %c0_4 = arith.constant 0 : index
    %2 = vector.load %arg1[%c0_3, %c0_4] : memref<32x1104xbf16, #tpu.memory_space<vmem>>, vector<32x1104xbf16>
    %cst = arith.constant dense<0.000000e+00> : vector<32x8xf32>
    %3 = tpu.matmul %2, %0, %cst {dimension_numbers = #tpu.dot_dimension_numbers<[1], [0], [0], [1], [0, 0, 1, 1], [], []>} : vector<32x1104xbf16>, vector<1104x8xbf16>, vector<32x8xf32> -> vector<32x8xf32>
    %4 = vector.broadcast %1 : vector<1x8xf32> to vector<32x8xf32>
    %5 = arith.addf %3, %4 : vector<32x8xf32>
    %c0_5 = arith.constant 0 : index
    %c0_6 = arith.constant 0 : index
    %6 = vector.load %arg2[%c0_5, %c0_6] : memref<32x1104xbf16, #tpu.memory_space<vmem>>, vector<32x1104xbf16>
    %cst_7 = arith.constant dense<0.000000e+00> : vector<32x8xf32>
    %7 = tpu.matmul %6, %0, %cst_7 {dimension_numbers = #tpu.dot_dimension_numbers<[1], [0], [0], [1], [0, 0, 1, 1], [], []>} : vector<32x1104xbf16>, vector<1104x8xbf16>, vector<32x8xf32> -> vector<32x8xf32>
    %8 = vector.broadcast %1 : vector<1x8xf32> to vector<32x8xf32>
    %9 = arith.addf %7, %8 : vector<32x8xf32>
    %c0_8 = arith.constant 0 : index
    %c0_9 = arith.constant 0 : index
    %10 = vector.load %arg6[%c0_8, %c0_9] : memref<8x8xf32, #tpu.memory_space<vmem>>, vector<8x8xf32>
    %c0_10 = arith.constant 0 : index
    %c0_11 = arith.constant 0 : index
    %11 = vector.load %arg7[%c0_10, %c0_11] : memref<8x8xf32, #tpu.memory_space<vmem>>, vector<8x8xf32>
    %c0_12 = arith.constant 0 : index
    %c0_13 = arith.constant 0 : index
    %12 = vector.load %arg8[%c0_12, %c0_13] : memref<1x8xf32, #tpu.memory_space<vmem>>, vector<1x8xf32>
    %cst_14 = arith.constant dense<0.000000e+00> : vector<32x8xf32>
    %13 = tpu.matmul %5, %10, %cst_14 {dimension_numbers = #tpu.dot_dimension_numbers<[1], [0], [0], [1], [0, 0, 1, 1], [], []>} : vector<32x8xf32>, vector<8x8xf32>, vector<32x8xf32> -> vector<32x8xf32>
    %cst_15 = arith.constant dense<0.000000e+00> : vector<32x8xf32>
    %14 = tpu.matmul %9, %11, %cst_15 {dimension_numbers = #tpu.dot_dimension_numbers<[1], [0], [0], [1], [0, 0, 1, 1], [], []>} : vector<32x8xf32>, vector<8x8xf32>, vector<32x8xf32> -> vector<32x8xf32>
    %15 = arith.addf %13, %14 : vector<32x8xf32>
    %16 = vector.broadcast %12 : vector<1x8xf32> to vector<32x8xf32>
    %17 = arith.addf %15, %16 : vector<32x8xf32>
    %cst_16 = arith.constant dense<0.000000e+00> : vector<32x8xf32>
    %18 = tpu.matmul %9, %10, %cst_16 {dimension_numbers = #tpu.dot_dimension_numbers<[1], [0], [0], [1], [0, 0, 1, 1], [], []>} : vector<32x8xf32>, vector<8x8xf32>, vector<32x8xf32> -> vector<32x8xf32>
    %cst_17 = arith.constant dense<0.000000e+00> : vector<32x8xf32>
    %19 = tpu.matmul %17, %11, %cst_17 {dimension_numbers = #tpu.dot_dimension_numbers<[1], [0], [0], [1], [0, 0, 1, 1], [], []>} : vector<32x8xf32>, vector<8x8xf32>, vector<32x8xf32> -> vector<32x8xf32>
    %20 = arith.addf %18, %19 : vector<32x8xf32>
    %21 = vector.broadcast %12 : vector<1x8xf32> to vector<32x8xf32>
    %22 = arith.addf %20, %21 : vector<32x8xf32>
    %23 = vector.extract_strided_slice %22 {offsets = [0, 0], sizes = [32, 4], strides = [1, 1]} : vector<32x8xf32> to vector<32x4xf32>
    %24 = vector.extract_strided_slice %22 {offsets = [0, 4], sizes = [32, 4], strides = [1, 1]} : vector<32x8xf32> to vector<32x4xf32>
    %cst_18 = arith.constant -3.000000e+01 : f32
    %cst_19 = arith.constant 2.000000e+01 : f32
    %25 = vector.broadcast %cst_18 : f32 to vector<32x4xf32>
    %26 = arith.maximumf %25, %24 : vector<32x4xf32>
    %27 = vector.broadcast %cst_19 : f32 to vector<32x4xf32>
    %28 = arith.minimumf %27, %26 : vector<32x4xf32>
    %cst_20 = arith.constant 5.000000e-01 : f32
    %29 = vector.broadcast %cst_20 : f32 to vector<32x4xf32>
    %30 = arith.mulf %29, %28 : vector<32x4xf32>
    %31 = math.exp %30 : vector<32x4xf32>
    %c0_21 = arith.constant 0 : index
    %c0_22 = arith.constant 0 : index
    %32 = vector.load %arg3[%c0_21, %c0_22] : memref<32x4xf32, #tpu.memory_space<vmem>>, vector<32x4xf32>
    %33 = arith.mulf %31, %32 : vector<32x4xf32>
    %34 = arith.addf %23, %33 : vector<32x4xf32>
    %c0_23 = arith.constant 0 : index
    %c0_24 = arith.constant 0 : index
    %35 = vector.load %arg9[%c0_23, %c0_24] : memref<4x1104xf32, #tpu.memory_space<vmem>>, vector<4x1104xf32>
    %cst_25 = arith.constant dense<0.000000e+00> : vector<32x1104xf32>
    %36 = tpu.matmul %34, %35, %cst_25 {dimension_numbers = #tpu.dot_dimension_numbers<[1], [0], [0], [1], [0, 0, 1, 1], [], []>} : vector<32x4xf32>, vector<4x1104xf32>, vector<32x1104xf32> -> vector<32x1104xf32>
    %c0_26 = arith.constant 0 : index
    %c0_27 = arith.constant 0 : index
    %37 = vector.load %arg10[%c0_26, %c0_27] : memref<1x1104xf32, #tpu.memory_space<vmem>>, vector<1x1104xf32>
    %38 = vector.broadcast %37 : vector<1x1104xf32> to vector<32x1104xf32>
    %39 = arith.addf %36, %38 : vector<32x1104xf32>
    %c0_28 = arith.constant 0 : index
    %c0_29 = arith.constant 0 : index
    %40 = vector.load %arg11[%c0_28, %c0_29] : memref<32x1104xf32, #tpu.memory_space<vmem>>, vector<32x1104xf32>
    tpu.vector_store %arg11[%c0_28, %c0_29], %39 {strides = array<i32>} : memref<32x1104xf32, #tpu.memory_space<vmem>>, vector<32x1104xf32>,
    return
  }
  func.func @transform_0(%arg0: i32) -> (i32, i32) {
    %c0_i32 = arith.constant 0 : i32
    %c0_i32_0 = arith.constant 0 : i32
    return %arg0, %c0_i32 : i32, i32
  }
  func.func @transform_1(%arg0: i32) -> (i32, i32) {
    %c0_i32 = arith.constant 0 : i32
    %c0_i32_0 = arith.constant 0 : i32
    return %arg0, %c0_i32 : i32, i32
  }
  func.func @transform_2(%arg0: i32) -> (i32, i32) {
    %c0_i32 = arith.constant 0 : i32
    %c0_i32_0 = arith.constant 0 : i32
    return %arg0, %c0_i32 : i32, i32
  }
  func.func @transform_3(%arg0: i32) -> (i32, i32) {
    %c0_i32 = arith.constant 0 : i32
    %c0_i32_0 = arith.constant 0 : i32
    %c0_i32_1 = arith.constant 0 : i32
    return %c0_i32, %c0_i32_0 : i32, i32
  }
  func.func @transform_4(%arg0: i32) -> (i32, i32) {
    %c0_i32 = arith.constant 0 : i32
    %c0_i32_0 = arith.constant 0 : i32
    %c0_i32_1 = arith.constant 0 : i32
    return %c0_i32, %c0_i32_0 : i32, i32
  }
  func.func @transform_5(%arg0: i32) -> (i32, i32) {
    %c0_i32 = arith.constant 0 : i32
    %c0_i32_0 = arith.constant 0 : i32
    %c0_i32_1 = arith.constant 0 : i32
    return %c0_i32, %c0_i32_0 : i32, i32
  }
  func.func @transform_6(%arg0: i32) -> (i32, i32) {
    %c0_i32 = arith.constant 0 : i32
    %c0_i32_0 = arith.constant 0 : i32
    %c0_i32_1 = arith.constant 0 : i32
    return %c0_i32, %c0_i32_0 : i32, i32
  }
  func.func @transform_7(%arg0: i32) -> (i32, i32) {
    %c0_i32 = arith.constant 0 : i32
    %c0_i32_0 = arith.constant 0 : i32
    %c0_i32_1 = arith.constant 0 : i32
    return %c0_i32, %c0_i32_0 : i32, i32
  }
  func.func @transform_8(%arg0: i32) -> (i32, i32) {
    %c0_i32 = arith.constant 0 : i32
    %c0_i32_0 = arith.constant 0 : i32
    %c0_i32_1 = arith.constant 0 : i32
    return %c0_i32, %c0_i32_0 : i32, i32
  }
  func.func @transform_9(%arg0: i32) -> (i32, i32) {
    %c0_i32 = arith.constant 0 : i32
    %c0_i32_0 = arith.constant 0 : i32
    %c0_i32_1 = arith.constant 0 : i32
    return %c0_i32, %c0_i32_0 : i32, i32
  }
  func.func @transform_10(%arg0: i32) -> (i32, i32) {
    %c0_i32 = arith.constant 0 : i32
    %c0_i32_0 = arith.constant 0 : i32
    return %arg0, %c0_i32 : i32, i32
  }
}

</mosaic_0001>

<llo_original>
// kernel: tpu_custom_call.1
$region0: #{tpu_custom_call.1}
  #allocation0 [shape = 'u32[]', space=smem, size = 0x4, offset = 0x4, fixed_abs, tag = 'smem constant byte address 0x4 - core index']
  #allocation1 [shape = 'u32[144,128]{1,0:T(1,128)}', space=vmem, size = 0x12000, scoped, tag = 'internal scratch']
  %s0 = inlined_call_operand.vmem [shape: bf16[32,1104], index: 0, kind: input, shape index: {}]
  %s1 = inlined_call_operand.vmem [shape: bf16[32,1104], index: 1, kind: input, shape index: {}]
  %s2 = inlined_call_operand.vmem [shape: f32[32,4], index: 2, kind: input, shape index: {}]
  %s3 = inlined_call_operand.vmem [shape: bf16[1104,8], index: 3, kind: input, shape index: {}]
  %s4 = inlined_call_operand.vmem [shape: f32[1,8], index: 4, kind: input, shape index: {}]
  %s5 = inlined_call_operand.vmem [shape: f32[8,8], index: 5, kind: input, shape index: {}]
  %s6 = inlined_call_operand.vmem [shape: f32[8,8], index: 6, kind: input, shape index: {}]
  %s7 = inlined_call_operand.vmem [shape: f32[1,8], index: 7, kind: input, shape index: {}]
  %s8 = inlined_call_operand.vmem [shape: f32[4,1104], index: 8, kind: input, shape index: {}]
  %s9 = inlined_call_operand.vmem [shape: f32[1,1104], index: 9, kind: input, shape index: {}]
  %s10 = inlined_call_operand.hbm [shape: f32[32,1104], index: 10, kind: output, shape index: {}]
  %s11 = sld [smem:[#allocation0]]
  $region50: #{tpu_custom_call.1} parent=0
    _
  %s13 = ssub.s32 1, %s11
  %s14 = scalar_select 0, %s13, %s11
  $region1: #{tpu_custom_call.1} parent=0
    #allocation2 [shape = 'u8[147456]{0}', space=vmem, size = 0x24000, scoped, tag = 'output window, operand 0, single buffered']
    #allocation3 [shape = 's32[1]{0}', space=sflag, size = 0x4, scoped, tag = 'scoped memory for tpu_custom_call.1']
    %15 = vsyncpa [#allocation3], 0
    // Predicated region
    $region2: #{tpu_custom_call.1} parent=1 // pred_check
      _
    $region3: #{tpu_custom_call.1} parent=1 // pred_check_branch
      %17 = sbr.rel (0) target = $region5
    $region4: #{tpu_custom_call.1} parent=1 // pred_region
      _
    $region5: #{tpu_custom_call.1} parent=1 // pred_fallthru
      _
    // Predicated region
    $region6: #{tpu_custom_call.1} parent=1 // pred_check
      _
    $region7: #{tpu_custom_call.1} parent=1 // pred_check_branch
      %19 = sbr.rel (0) target = $region9
    $region8: #{tpu_custom_call.1} parent=1 // pred_region
      _
    $region9: #{tpu_custom_call.1} parent=1 // pred_fallthru
      _
    // Predicated region
    $region10: #{tpu_custom_call.1} parent=1 // pred_check
      _
    $region11: #{tpu_custom_call.1} parent=1 // pred_check_branch
      %21 = sbr.rel (0) target = $region13
    $region12: #{tpu_custom_call.1} parent=1 // pred_region
      _
    $region13: #{tpu_custom_call.1} parent=1 // pred_fallthru
      _
    // Predicated region
    $region14: #{tpu_custom_call.1} parent=1 // pred_check
      _
    $region15: #{tpu_custom_call.1} parent=1 // pred_check_branch
      %23 = sbr.rel (0) target = $region17
    $region16: #{tpu_custom_call.1} parent=1 // pred_region
      _
    $region17: #{tpu_custom_call.1} parent=1 // pred_fallthru
      _
    // Predicated region
    $region18: #{tpu_custom_call.1} parent=1 // pred_check
      _
    $region19: #{tpu_custom_call.1} parent=1 // pred_check_branch
      %25 = sbr.rel (0) target = $region21
    $region20: #{tpu_custom_call.1} parent=1 // pred_region
      _
    $region21: #{tpu_custom_call.1} parent=1 // pred_fallthru
      _
    // Predicated region
    $region22: #{tpu_custom_call.1} parent=1 // pred_check
      _
    $region23: #{tpu_custom_call.1} parent=1 // pred_check_branch
      %27 = sbr.rel (0) target = $region25
    $region24: #{tpu_custom_call.1} parent=1 // pred_region
      _
    $region25: #{tpu_custom_call.1} parent=1 // pred_fallthru
      _
    // Predicated region
    $region26: #{tpu_custom_call.1} parent=1 // pred_check
      _
    $region27: #{tpu_custom_call.1} parent=1 // pred_check_branch
      %29 = sbr.rel (0) target = $region29
    $region28: #{tpu_custom_call.1} parent=1 // pred_region
      _
    $region29: #{tpu_custom_call.1} parent=1 // pred_fallthru
      _
    // Predicated region
    $region30: #{tpu_custom_call.1} parent=1 // pred_check
      _
    $region31: #{tpu_custom_call.1} parent=1 // pred_check_branch
      %31 = sbr.rel (0) target = $region33
    $region32: #{tpu_custom_call.1} parent=1 // pred_region
      _
    $region33: #{tpu_custom_call.1} parent=1 // pred_fallthru
      _
    // Predicated region
    $region34: #{tpu_custom_call.1} parent=1 // pred_check
      _
    $region35: #{tpu_custom_call.1} parent=1 // pred_check_branch
      %33 = sbr.rel (0) target = $region37
    $region36: #{tpu_custom_call.1} parent=1 // pred_region
      _
    $region37: #{tpu_custom_call.1} parent=1 // pred_fallthru
      _
    // Predicated region
    $region38: #{tpu_custom_call.1} parent=1 // pred_check
      _
    $region39: #{tpu_custom_call.1} parent=1 // pred_check_branch
      %35 = sbr.rel (0) target = $region41
    $region40: #{tpu_custom_call.1} parent=1 // pred_region
      _
    $region41: #{tpu_custom_call.1} parent=1 // pred_fallthru
      _
    %v37 = vld [vmem:[%s3] sm:$0xf]
    %v38 = vld [vmem:[%s3 + $0x4] sm:$0xf]
    %v39 = vld [vmem:[%s3 + $0x8] sm:$0xf]
    %v40 = vld [vmem:[%s3 + $0xc] sm:$0xf]
    %v41 = vld [vmem:[%s3 + $0x10] sm:$0xf]
    %v42 = vld [vmem:[%s3 + $0x14] sm:$0xf]
    %v43 = vld [vmem:[%s3 + $0x18] sm:$0xf]
    %v44 = vld [vmem:[%s3 + $0x1c] sm:$0xf]
    %v45 = vld [vmem:[%s3 + $0x20] sm:$0xf]
    %v46 = vld [vmem:[%s3 + $0x24] sm:$0xf]
    %v47 = vld [vmem:[%s3 + $0x28] sm:$0xf]
    %v48 = vld [vmem:[%s3 + $0x2c] sm:$0xf]
    %v49 = vld [vmem:[%s3 + $0x30] sm:$0xf]
    %v50 = vld [vmem:[%s3 + $0x34] sm:$0xf]
    %v51 = vld [vmem:[%s3 + $0x38] sm:$0xf]
    %v52 = vld [vmem:[%s3 + $0x3c] sm:$0xf]
    %v53 = vld [vmem:[%s3 + $0x40] sm:$0xf]
    %v54 = vld [vmem:[%s3 + $0x44] sm:$0xf]
    %v55 = vld [vmem:[%s3 + $0x48] sm:$0xf]
    %v56 = vld [vmem:[%s3 + $0x4c] sm:$0xf]
    %v57 = vld [vmem:[%s3 + $0x50] sm:$0xf]
    %v58 = vld [vmem:[%s3 + $0x54] sm:$0xf]
    %v59 = vld [vmem:[%s3 + $0x58] sm:$0xf]
    %v60 = vld [vmem:[%s3 + $0x5c] sm:$0xf]
    %v61 = vld [vmem:[%s3 + $0x60] sm:$0xf]
    %v62 = vld [vmem:[%s3 + $0x64] sm:$0xf]
    %v63 = vld [vmem:[%s3 + $0x68] sm:$0xf]
    %v64 = vld [vmem:[%s3 + $0x6c] sm:$0xf]
    %v65 = vld [vmem:[%s3 + $0x70] sm:$0xf]
    %v66 = vld [vmem:[%s3 + $0x74] sm:$0xf]
    %v67 = vld [vmem:[%s3 + $0x78] sm:$0xf]
    %v68 = vld [vmem:[%s3 + $0x7c] sm:$0xf]
    %v69 = vld [vmem:[%s3 + $0x80] sm:$0xf]
    %v70 = vld [vmem:[%s3 + $0x84] sm:$0xf]
    %v71 = vld [vmem:[%s3 + $0x88] sm:$0xf]
    %v72 = vld [vmem:[%s3 + $0x8c] sm:$0xf]
    %v73 = vld [vmem:[%s3 + $0x90] sm:$0xf]
    %v74 = vld [vmem:[%s3 + $0x94] sm:$0xf]
    %v75 = vld [vmem:[%s3 + $0x98] sm:$0xf]
    %v76 = vld [vmem:[%s3 + $0x9c] sm:$0xf]
    %v77 = vld [vmem:[%s3 + $0xa0] sm:$0xf]
    %v78 = vld [vmem:[%s3 + $0xa4] sm:$0xf]
    %v79 = vld [vmem:[%s3 + $0xa8] sm:$0xf]
    %v80 = vld [vmem:[%s3 + $0xac] sm:$0xf]
    %v81 = vld [vmem:[%s3 + $0xb0] sm:$0xf]
    %v82 = vld [vmem:[%s3 + $0xb4] sm:$0xf]
    %v83 = vld [vmem:[%s3 + $0xb8] sm:$0xf]
    %v84 = vld [vmem:[%s3 + $0xbc] sm:$0xf]
    %v85 = vld [vmem:[%s3 + $0xc0] sm:$0xf]
    %v86 = vld [vmem:[%s3 + $0xc4] sm:$0xf]
    %v87 = vld [vmem:[%s3 + $0xc8] sm:$0xf]
    %v88 = vld [vmem:[%s3 + $0xcc] sm:$0xf]
    %v89 = vld [vmem:[%s3 + $0xd0] sm:$0xf]
    %v90 = vld [vmem:[%s3 + $0xd4] sm:$0xf]
    %v91 = vld [vmem:[%s3 + $0xd8] sm:$0xf]
    %v92 = vld [vmem:[%s3 + $0xdc] sm:$0xf]
    %v93 = vld [vmem:[%s3 + $0xe0] sm:$0xf]
    %v94 = vld [vmem:[%s3 + $0xe4] sm:$0xf]
    %v95 = vld [vmem:[%s3 + $0xe8] sm:$0xf]
    %v96 = vld [vmem:[%s3 + $0xec] sm:$0xf]
    %v97 = vld [vmem:[%s3 + $0xf0] sm:$0xf]
    %v98 = vld [vmem:[%s3 + $0xf4] sm:$0xf]
    %v99 = vld [vmem:[%s3 + $0xf8] sm:$0xf]
    %v100 = vld [vmem:[%s3 + $0xfc] sm:$0xf]
    %v101 = vld [vmem:[%s3 + $0x100] sm:$0xf]
    %v102 = vld [vmem:[%s3 + $0x104] sm:$0xf]
    %v103 = vld [vmem:[%s3 + $0x108] sm:$0xf]
    %v104 = vld [vmem:[%s3 + $0x10c] sm:$0xf]
    %v105 = vld [vmem:[%s3 + $0x110] sm:$0xf]
    %v106 = vld [vmem:[%s3 + $0x114] sm:$0xf]
    %v107 = vld [vmem:[%s3 + $0x118] sm:$0xf]
    %v108 = vld [vmem:[%s3 + $0x11c] sm:$0xf]
    %v109 = vld [vmem:[%s3 + $0x120] sm:$0xf]
    %v110 = vld [vmem:[%s3 + $0x124] sm:$0xf]
    %v111 = vld [vmem:[%s3 + $0x128] sm:$0xf]
    %v112 = vld [vmem:[%s3 + $0x12c] sm:$0xf]
    %v113 = vld [vmem:[%s3 + $0x130] sm:$0xf]
    %v114 = vld [vmem:[%s3 + $0x134] sm:$0xf]
    %v115 = vld [vmem:[%s3 + $0x138] sm:$0xf]
    %v116 = vld [vmem:[%s3 + $0x13c] sm:$0xf]
    %v117 = vld [vmem:[%s3 + $0x140] sm:$0xf]
    %v118 = vld [vmem:[%s3 + $0x144] sm:$0xf]
    %v119 = vld [vmem:[%s3 + $0x148] sm:$0xf]
    %v120 = vld [vmem:[%s3 + $0x14c] sm:$0xf]
    %v121 = vld [vmem:[%s3 + $0x150] sm:$0xf]
    %v122 = vld [vmem:[%s3 + $0x154] sm:$0xf]
    %v123 = vld [vmem:[%s3 + $0x158] sm:$0xf]
    %v124 = vld [vmem:[%s3 + $0x15c] sm:$0xf]
    %v125 = vld [vmem:[%s3 + $0x160] sm:$0xf]
    %v126 = vld [vmem:[%s3 + $0x164] sm:$0xf]
    %v127 = vld [vmem:[%s3 + $0x168] sm:$0xf]
    %v128 = vld [vmem:[%s3 + $0x16c] sm:$0xf]
    %v129 = vld [vmem:[%s3 + $0x170] sm:$0xf]
    %v130 = vld [vmem:[%s3 + $0x174] sm:$0xf]
    %v131 = vld [vmem:[%s3 + $0x178] sm:$0xf]
    %v132 = vld [vmem:[%s3 + $0x17c] sm:$0xf]
    %v133 = vld [vmem:[%s3 + $0x180] sm:$0xf]
    %v134 = vld [vmem:[%s3 + $0x184] sm:$0xf]
    %v135 = vld [vmem:[%s3 + $0x188] sm:$0xf]
    %v136 = vld [vmem:[%s3 + $0x18c] sm:$0xf]
    %v137 = vld [vmem:[%s3 + $0x190] sm:$0xf]
    %v138 = vld [vmem:[%s3 + $0x194] sm:$0xf]
    %v139 = vld [vmem:[%s3 + $0x198] sm:$0xf]
    %v140 = vld [vmem:[%s3 + $0x19c] sm:$0xf]
    %v141 = vld [vmem:[%s3 + $0x1a0] sm:$0xf]
    %v142 = vld [vmem:[%s3 + $0x1a4] sm:$0xf]
    %v143 = vld [vmem:[%s3 + $0x1a8] sm:$0xf]
    %v144 = vld [vmem:[%s3 + $0x1ac] sm:$0xf]
    %v145 = vld [vmem:[%s3 + $0x1b0] sm:$0xf]
    %v146 = vld [vmem:[%s3 + $0x1b4] sm:$0xf]
    %v147 = vld [vmem:[%s3 + $0x1b8] sm:$0xf]
    %v148 = vld [vmem:[%s3 + $0x1bc] sm:$0xf]
    %v149 = vld [vmem:[%s3 + $0x1c0] sm:$0xf]
    %v150 = vld [vmem:[%s3 + $0x1c4] sm:$0xf]
    %v151 = vld [vmem:[%s3 + $0x1c8] sm:$0xf]
    %v152 = vld [vmem:[%s3 + $0x1cc] sm:$0xf]
    %v153 = vld [vmem:[%s3 + $0x1d0] sm:$0xf]
    %v154 = vld [vmem:[%s3 + $0x1d4] sm:$0xf]
    %v155 = vld [vmem:[%s3 + $0x1d8] sm:$0xf]
    %v156 = vld [vmem:[%s3 + $0x1dc] sm:$0xf]
    %v157 = vld [vmem:[%s3 + $0x1e0] sm:$0xf]
    %v158 = vld [vmem:[%s3 + $0x1e4] sm:$0xf]
    %v159 = vld [vmem:[%s3 + $0x1e8] sm:$0xf]
    %v160 = vld [vmem:[%s3 + $0x1ec] sm:$0xf]
    %v161 = vld [vmem:[%s3 + $0x1f0] sm:$0xf]
    %v162 = vld [vmem:[%s3 + $0x1f4] sm:$0xf]
    %v163 = vld [vmem:[%s3 + $0x1f8] sm:$0xf]
    %v164 = vld [vmem:[%s3 + $0x1fc] sm:$0xf]
    %v165 = vld [vmem:[%s3 + $0x200] sm:$0xf]
    %v166 = vld [vmem:[%s3 + $0x204] sm:$0xf]
    %v167 = vld [vmem:[%s3 + $0x208] sm:$0xf]
    %v168 = vld [vmem:[%s3 + $0x20c] sm:$0xf]
    %v169 = vld [vmem:[%s3 + $0x210] sm:$0xf]
    %v170 = vld [vmem:[%s3 + $0x214] sm:$0xf]
    %v171 = vld [vmem:[%s3 + $0x218] sm:$0xf]
    %v172 = vld [vmem:[%s3 + $0x21c] sm:$0xf]
    %v173 = vld [vmem:[%s3 + $0x220] sm:$0xf]
    %v174 = vld [vmem:[%s3 + $0x224] sm:$0xf]
    %v175 = vld [vmem:[%s4] sm:$0x1]
    %v176 = vld [vmem:[%s0] sm:$0xff]
    %v177 = vld [vmem:[%s0 + $0x8] sm:$0xff]
    %v178 = vld [vmem:[%s0 + $0x10] sm:$0xff]
    %v179 = vld [vmem:[%s0 + $0x18] sm:$0xff]
    %v180 = vld [vmem:[%s0 + $0x20] sm:$0xf]
    %v181 = vld [vmem:[%s0 + $0x24] sm:$0xff]
    %v182 = vld [vmem:[%s0 + $0x2c] sm:$0xff]
    %v183 = vld [vmem:[%s0 + $0x34] sm:$0xff]
    %v184 = vld [vmem:[%s0 + $0x3c] sm:$0xff]
    %v185 = vld [vmem:[%s0 + $0x44] sm:$0xf]
    %v186 = vld [vmem:[%s0 + $0x48] sm:$0xff]
    %v187 = vld [vmem:[%s0 + $0x50] sm:$0xff]
    %v188 = vld [vmem:[%s0 + $0x58] sm:$0xff]
    %v189 = vld [vmem:[%s0 + $0x60] sm:$0xff]
    %v190 = vld [vmem:[%s0 + $0x68] sm:$0xf]
    %v191 = vld [vmem:[%s0 + $0x6c] sm:$0xff]
    %v192 = vld [vmem:[%s0 + $0x74] sm:$0xff]
    %v193 = vld [vmem:[%s0 + $0x7c] sm:$0xff]
    %v194 = vld [vmem:[%s0 + $0x84] sm:$0xff]
    %v195 = vld [vmem:[%s0 + $0x8c] sm:$0xf]
    %v197 = vlaneseq
    %v198 = vshrl.u32 %v197, 7
    %v199 = vsub.s32 0, %v198
    %v200 = vrot.slane %v175, %v199
    %v222 = vunpack.c.l.b16 %v176
    %v223 = vunpack.c.h.b16 %v176
    %v224 = vunpack.c.l.b16 %v177
    %v225 = vunpack.c.h.b16 %v177
    %v226 = vunpack.c.l.b16 %v178
    %v227 = vunpack.c.h.b16 %v178
    %v228 = vunpack.c.l.b16 %v179
    %v229 = vunpack.c.h.b16 %v179
    %v230 = vunpack.c.l.b16 %v180
    %v231 = vunpack.c.l.b16 %v181
    %v232 = vunpack.c.h.b16 %v181
    %v233 = vunpack.c.l.b16 %v182
    %v234 = vunpack.c.h.b16 %v182
    %v235 = vunpack.c.l.b16 %v183
    %v236 = vunpack.c.h.b16 %v183
    %v237 = vunpack.c.l.b16 %v184
    %v238 = vunpack.c.h.b16 %v184
    %v239 = vunpack.c.l.b16 %v185
    %v240 = vunpack.c.l.b16 %v186
    %v241 = vunpack.c.h.b16 %v186
    %v242 = vunpack.c.l.b16 %v187
    %v243 = vunpack.c.h.b16 %v187
    %v244 = vunpack.c.l.b16 %v188
    %v245 = vunpack.c.h.b16 %v188
    %v246 = vunpack.c.l.b16 %v189
    %v247 = vunpack.c.h.b16 %v189
    %v248 = vunpack.c.l.b16 %v190
    %v249 = vunpack.c.l.b16 %v191
    %v250 = vunpack.c.h.b16 %v191
    %v251 = vunpack.c.l.b16 %v192
    %v252 = vunpack.c.h.b16 %v192
    %v253 = vunpack.c.l.b16 %v193
    %v254 = vunpack.c.h.b16 %v193
    %v255 = vunpack.c.l.b16 %v194
    %v256 = vunpack.c.h.b16 %v194
    %v257 = vunpack.c.l.b16 %v195
    %v258 = vpack.c.b16 %v231, %v222
    %v259 = vpack.c.b16 %v232, %v223
    %v260 = vpack.c.b16 %v233, %v224
    %v261 = vpack.c.b16 %v234, %v225
    %v262 = vpack.c.b16 %v235, %v226
    %v263 = vpack.c.b16 %v236, %v227
    %v264 = vpack.c.b16 %v237, %v228
    %v265 = vpack.c.b16 %v238, %v229
    %v266 = vpack.c.b16 %v239, %v230
    %v267 = vpack.c.b16 %v249, %v240
    %v268 = vpack.c.b16 %v250, %v241
    %v269 = vpack.c.b16 %v251, %v242
    %v270 = vpack.c.b16 %v252, %v243
    %v271 = vpack.c.b16 %v253, %v244
    %v272 = vpack.c.b16 %v254, %v245
    %v273 = vpack.c.b16 %v255, %v246
    %v274 = vpack.c.b16 %v256, %v247
    %v275 = vpack.c.b16 %v257, %v248
    %v430 = vunpack.c.l.b16 %v37
    %v431 = vunpack.c.l.b16 %v38
    %v432 = vunpack.c.l.b16 %v39
    %v433 = vunpack.c.l.b16 %v40
    %v434 = vunpack.c.l.b16 %v41
    %v435 = vunpack.c.l.b16 %v42
    %v436 = vunpack.c.l.b16 %v43
    %v437 = vunpack.c.l.b16 %v44
    %v438 = vunpack.c.l.b16 %v45
    %v439 = vunpack.c.l.b16 %v46
    %v440 = vunpack.c.l.b16 %v47
    %v441 = vunpack.c.l.b16 %v48
    %v442 = vunpack.c.l.b16 %v49
    %v443 = vunpack.c.l.b16 %v50
    %v444 = vunpack.c.l.b16 %v51
    %v445 = vunpack.c.l.b16 %v52
    %v446 = vunpack.c.l.b16 %v53
    %v447 = vunpack.c.l.b16 %v54
    %v448 = vunpack.c.l.b16 %v55
    %v449 = vunpack.c.l.b16 %v56
    %v450 = vunpack.c.l.b16 %v57
    %v451 = vunpack.c.l.b16 %v58
    %v452 = vunpack.c.l.b16 %v59
    %v453 = vunpack.c.l.b16 %v60
    %v454 = vunpack.c.l.b16 %v61
    %v455 = vunpack.c.l.b16 %v62
    %v456 = vunpack.c.l.b16 %v63
    %v457 = vunpack.c.l.b16 %v64
    %v458 = vunpack.c.l.b16 %v65
    %v459 = vunpack.c.l.b16 %v66
    %v460 = vunpack.c.l.b16 %v67
    %v461 = vunpack.c.l.b16 %v68
    %v462 = vunpack.c.l.b16 %v69
    %v463 = vunpack.c.l.b16 %v70
    %v464 = vunpack.c.l.b16 %v71
    %v465 = vunpack.c.l.b16 %v72
    %v466 = vunpack.c.l.b16 %v73
    %v467 = vunpack.c.l.b16 %v74
    %v468 = vunpack.c.l.b16 %v75
    %v469 = vunpack.c.l.b16 %v76
    %v470 = vunpack.c.l.b16 %v77
    %v471 = vunpack.c.l.b16 %v78
    %v472 = vunpack.c.l.b16 %v79
    %v473 = vunpack.c.l.b16 %v80
    %v474 = vunpack.c.l.b16 %v81
    %v475 = vunpack.c.l.b16 %v82
    %v476 = vunpack.c.l.b16 %v83
    %v477 = vunpack.c.l.b16 %v84
    %v478 = vunpack.c.l.b16 %v85
    %v479 = vunpack.c.l.b16 %v86
    %v480 = vunpack.c.l.b16 %v87
    %v481 = vunpack.c.l.b16 %v88
    %v482 = vunpack.c.l.b16 %v89
    %v483 = vunpack.c.l.b16 %v90
    %v484 = vunpack.c.l.b16 %v91
    %v485 = vunpack.c.l.b16 %v92
    %v486 = vunpack.c.l.b16 %v93
    %v487 = vunpack.c.l.b16 %v94
    %v488 = vunpack.c.l.b16 %v95
    %v489 = vunpack.c.l.b16 %v96
    %v490 = vunpack.c.l.b16 %v97
    %v491 = vunpack.c.l.b16 %v98
    %v492 = vunpack.c.l.b16 %v99
    %v493 = vunpack.c.l.b16 %v100
    %v494 = vunpack.c.l.b16 %v101
    %v495 = vunpack.c.l.b16 %v102
    %v496 = vunpack.c.l.b16 %v103
    %v497 = vunpack.c.l.b16 %v104
    %v498 = vunpack.c.l.b16 %v105
    %v499 = vunpack.c.l.b16 %v106
    %v500 = vunpack.c.l.b16 %v107
    %v501 = vunpack.c.l.b16 %v108
    %v502 = vunpack.c.l.b16 %v109
    %v503 = vunpack.c.l.b16 %v110
    %v504 = vunpack.c.l.b16 %v111
    %v505 = vunpack.c.l.b16 %v112
    %v506 = vunpack.c.l.b16 %v113
    %v507 = vunpack.c.l.b16 %v114
    %v508 = vunpack.c.l.b16 %v115
    %v509 = vunpack.c.l.b16 %v116
    %v510 = vunpack.c.l.b16 %v117
    %v511 = vunpack.c.l.b16 %v118
    %v512 = vunpack.c.l.b16 %v119
    %v513 = vunpack.c.l.b16 %v120
    %v514 = vunpack.c.l.b16 %v121
    %v515 = vunpack.c.l.b16 %v122
    %v516 = vunpack.c.l.b16 %v123
    %v517 = vunpack.c.l.b16 %v124
    %v518 = vunpack.c.l.b16 %v125
    %v519 = vunpack.c.l.b16 %v126
    %v520 = vunpack.c.l.b16 %v127
    %v521 = vunpack.c.l.b16 %v128
    %v522 = vunpack.c.l.b16 %v129
    %v523 = vunpack.c.l.b16 %v130
    %v524 = vunpack.c.l.b16 %v131
    %v525 = vunpack.c.l.b16 %v132
    %v526 = vunpack.c.l.b16 %v133
    %v527 = vunpack.c.l.b16 %v134
    %v528 = vunpack.c.l.b16 %v135
    %v529 = vunpack.c.l.b16 %v136
    %v530 = vunpack.c.l.b16 %v137
    %v531 = vunpack.c.l.b16 %v138
    %v532 = vunpack.c.l.b16 %v139
    %v533 = vunpack.c.l.b16 %v140
    %v534 = vunpack.c.l.b16 %v141
    %v535 = vunpack.c.l.b16 %v142
    %v536 = vunpack.c.l.b16 %v143
    %v537 = vunpack.c.l.b16 %v144
    %v538 = vunpack.c.l.b16 %v145
    %v539 = vunpack.c.l.b16 %v146
    %v540 = vunpack.c.l.b16 %v147
    %v541 = vunpack.c.l.b16 %v148
    %v542 = vunpack.c.l.b16 %v149
    %v543 = vunpack.c.l.b16 %v150
    %v544 = vunpack.c.l.b16 %v151
    %v545 = vunpack.c.l.b16 %v152
    %v546 = vunpack.c.l.b16 %v153
    %v547 = vunpack.c.l.b16 %v154
    %v548 = vunpack.c.l.b16 %v155
    %v549 = vunpack.c.l.b16 %v156
    %v550 = vunpack.c.l.b16 %v157
    %v551 = vunpack.c.l.b16 %v158
    %v552 = vunpack.c.l.b16 %v159
    %v553 = vunpack.c.l.b16 %v160
    %v554 = vunpack.c.l.b16 %v161
    %v555 = vunpack.c.l.b16 %v162
    %v556 = vunpack.c.l.b16 %v163
    %v557 = vunpack.c.l.b16 %v164
    %v558 = vunpack.c.l.b16 %v165
    %v559 = vunpack.c.l.b16 %v166
    %v560 = vunpack.c.l.b16 %v167
    %v561 = vunpack.c.l.b16 %v168
    %v562 = vunpack.c.l.b16 %v169
    %v563 = vunpack.c.l.b16 %v170
    %v564 = vunpack.c.l.b16 %v171
    %v565 = vunpack.c.l.b16 %v172
    %v566 = vunpack.c.l.b16 %v173
    %v567 = vunpack.c.l.b16 %v174
    %v568 = vpack.c.b16 %v431, %v430
    %v569 = vpack.c.b16 %v433, %v432
    %v570 = vpack.c.b16 %v435, %v434
    %v571 = vpack.c.b16 %v437, %v436
    %v572 = vpack.c.b16 %v439, %v438
    %v573 = vpack.c.b16 %v441, %v440
    %v574 = vpack.c.b16 %v443, %v442
    %v575 = vpack.c.b16 %v445, %v444
    %v576 = vpack.c.b16 %v447, %v446
    %v577 = vpack.c.b16 %v449, %v448
    %v578 = vpack.c.b16 %v451, %v450
    %v579 = vpack.c.b16 %v453, %v452
    %v580 = vpack.c.b16 %v455, %v454
    %v581 = vpack.c.b16 %v457, %v456
    %v582 = vpack.c.b16 %v459, %v458
    %v583 = vpack.c.b16 %v461, %v460
    %v584 = vpack.c.b16 %v463, %v462
    %v585 = vpack.c.b16 %v465, %v464
    %v586 = vpack.c.b16 %v467, %v466
    %v587 = vpack.c.b16 %v469, %v468
    %v588 = vpack.c.b16 %v471, %v470
    %v589 = vpack.c.b16 %v473, %v472
    %v590 = vpack.c.b16 %v475, %v474
    %v591 = vpack.c.b16 %v477, %v476
    %v592 = vpack.c.b16 %v479, %v478
    %v593 = vpack.c.b16 %v481, %v480
    %v594 = vpack.c.b16 %v483, %v482
    %v595 = vpack.c.b16 %v485, %v484
    %v596 = vpack.c.b16 %v487, %v486
    %v597 = vpack.c.b16 %v489, %v488
    %v598 = vpack.c.b16 %v491, %v490
    %v599 = vpack.c.b16 %v493, %v492
    %v600 = vpack.c.b16 %v495, %v494
    %v601 = vpack.c.b16 %v497, %v496
    %v602 = vpack.c.b16 %v499, %v498
    %v603 = vpack.c.b16 %v501, %v500
    %v604 = vpack.c.b16 %v503, %v502
    %v605 = vpack.c.b16 %v505, %v504
    %v606 = vpack.c.b16 %v507, %v506
    %v607 = vpack.c.b16 %v509, %v508
    %v608 = vpack.c.b16 %v511, %v510
    %v609 = vpack.c.b16 %v513, %v512
    %v610 = vpack.c.b16 %v515, %v514
    %v611 = vpack.c.b16 %v517, %v516
    %v612 = vpack.c.b16 %v519, %v518
    %v613 = vpack.c.b16 %v521, %v520
    %v614 = vpack.c.b16 %v523, %v522
    %v615 = vpack.c.b16 %v525, %v524
    %v616 = vpack.c.b16 %v527, %v526
    %v617 = vpack.c.b16 %v529, %v528
    %v618 = vpack.c.b16 %v531, %v530
    %v619 = vpack.c.b16 %v533, %v532
    %v620 = vpack.c.b16 %v535, %v534
    %v621 = vpack.c.b16 %v537, %v536
    %v622 = vpack.c.b16 %v539, %v538
    %v623 = vpack.c.b16 %v541, %v540
    %v624 = vpack.c.b16 %v543, %v542
    %v625 = vpack.c.b16 %v545, %v544
    %v626 = vpack.c.b16 %v547, %v546
    %v627 = vpack.c.b16 %v549, %v548
    %v628 = vpack.c.b16 %v551, %v550
    %v629 = vpack.c.b16 %v553, %v552
    %v630 = vpack.c.b16 %v555, %v554
    %v631 = vpack.c.b16 %v557, %v556
    %v632 = vpack.c.b16 %v559, %v558
    %v633 = vpack.c.b16 %v561, %v560
    %v634 = vpack.c.b16 %v563, %v562
    %v635 = vpack.c.b16 %v565, %v564
    %v636 = vpack.c.b16 %v567, %v566
    %vm706 = vcmask 654336
    %v708 = vsel %vm706, %v266, 0
    %v711 = vsel %vm706, %v275, 0
    %713 = vmatprep.subr.bf16.mxu0 0
    %714 = vmatpush1.bf16.msra.mxu0 %v575
    %715 = vmatprep.subr.bf16.mxu0 0
    %716 = vmatpush1.bf16.msra.mxu0 %v574
    %717 = vmatprep.subr.bf16.mxu0 0
    %718 = vmatpush1.bf16.msra.mxu0 %v573
    %719 = vmatprep.subr.bf16.mxu0 0
    %720 = vmatpush1.bf16.msra.mxu0 %v572
    %721 = vmatprep.subr.bf16.mxu0 0
    %722 = vmatpush1.bf16.msra.mxu0 %v571
    %723 = vmatprep.subr.bf16.mxu0 0
    %724 = vmatpush1.bf16.msra.mxu0 %v570
    %725 = vmatprep.subr.bf16.mxu0 0
    %726 = vmatpush1.bf16.msra.mxu0 %v569
    %727 = vmatprep.subr.bf16.mxu0 0
    %728 = vmatpush1.bf16.msra.mxu0 %v568
    %729 = vmatprep.subr.bf16.mxu0 0
    %730 = vmatpush2.bf16.msra.mxu0 %v583
    %731 = vmatprep.subr.bf16.mxu0 0
    %732 = vmatpush2.bf16.msra.mxu0 %v582
    %733 = vmatprep.subr.bf16.mxu0 0
    %734 = vmatpush2.bf16.msra.mxu0 %v581
    %735 = vmatprep.subr.bf16.mxu0 0
    %736 = vmatpush2.bf16.msra.mxu0 %v580
    %737 = vmatprep.subr.bf16.mxu0 0
    %738 = vmatpush2.bf16.msra.mxu0 %v579
    %739 = vmatprep.subr.bf16.mxu0 0
    %740 = vmatpush2.bf16.msra.mxu0 %v578
    %741 = vmatprep.subr.bf16.mxu0 0
    %742 = vmatpush2.bf16.msra.mxu0 %v577
    %743 = vmatprep.subr.bf16.mxu0 0
    %744 = vmatpush2.bf16.msra.mxu0 %v576
    %745 = vmatprep.mubr.bf16.mxu0 %v259
    %746 = vmatmul.mubr.bf16.gmra.mxu0 %v258
    %v747 = vpop.f32.mrf.mxu0
    %v748 = vadd.f32 %v200, %v747
    %v749 = vpop.f32.mrf.mxu0
    %v750 = vpop.f32.mrf.mxu0
    %v751 = vadd.f32 %v200, %v750
    %v752 = vpop.f32.mrf.mxu0
    %753 = vmatprep.mubr.bf16.mxu0 %v268
    %754 = vmatmul.mubr.bf16.gmra.mxu0 %v267
    %v755 = vpop.f32.mrf.mxu0
    %v756 = vadd.f32 %v200, %v755
    %v757 = vpop.f32.mrf.mxu0
    %v758 = vpop.f32.mrf.mxu0
    %v759 = vadd.f32 %v200, %v758
    %v760 = vpop.f32.mrf.mxu0
    %761 = vdwg.mxu0
    %762 = vmatprep.subr.bf16.mxu0 0
    %763 = vmatpush1.bf16.msra.mxu0 %v591
    %764 = vmatprep.subr.bf16.mxu0 0
    %765 = vmatpush1.bf16.msra.mxu0 %v590
    %766 = vmatprep.subr.bf16.mxu0 0
    %767 = vmatpush1.bf16.msra.mxu0 %v589
    %768 = vmatprep.subr.bf16.mxu0 0
    %769 = vmatpush1.bf16.msra.mxu0 %v588
    %770 = vmatprep.subr.bf16.mxu0 0
    %771 = vmatpush1.bf16.msra.mxu0 %v587
    %772 = vmatprep.subr.bf16.mxu0 0
    %773 = vmatpush1.bf16.msra.mxu0 %v586
    %774 = vmatprep.subr.bf16.mxu0 0
    %775 = vmatpush1.bf16.msra.mxu0 %v585
    %776 = vmatprep.subr.bf16.mxu0 0
    %777 = vmatpush1.bf16.msra.mxu0 %v584
    %778 = vmatprep.subr.bf16.mxu0 0
    %779 = vmatpush2.bf16.msra.mxu0 %v599
    %780 = vmatprep.subr.bf16.mxu0 0
    %781 = vmatpush2.bf16.msra.mxu0 %v598
    %782 = vmatprep.subr.bf16.mxu0 0
    %783 = vmatpush2.bf16.msra.mxu0 %v597
    %784 = vmatprep.subr.bf16.mxu0 0
    %785 = vmatpush2.bf16.msra.mxu0 %v596
    %786 = vmatprep.subr.bf16.mxu0 0
    %787 = vmatpush2.bf16.msra.mxu0 %v595
    %788 = vmatprep.subr.bf16.mxu0 0
    %789 = vmatpush2.bf16.msra.mxu0 %v594
    %790 = vmatprep.subr.bf16.mxu0 0
    %791 = vmatpush2.bf16.msra.mxu0 %v593
    %792 = vmatprep.subr.bf16.mxu0 0
    %793 = vmatpush2.bf16.msra.mxu0 %v592
    %794 = vmatprep.mubr.bf16.mxu0 %v261
    %795 = vmatmul.mubr.bf16.gmra.mxu0 %v260
    %v796 = vpop.f32.mrf.mxu0
    %v797 = vadd.f32 %v748, %v796
    %v798 = vpop.f32.mrf.mxu0
    %v799 = vpop.f32.mrf.mxu0
    %v800 = vadd.f32 %v751, %v799
    %v801 = vpop.f32.mrf.mxu0
    %802 = vmatprep.mubr.bf16.mxu0 %v270
    %803 = vmatmul.mubr.bf16.gmra.mxu0 %v269
    %v804 = vpop.f32.mrf.mxu0
    %v805 = vadd.f32 %v756, %v804
    %v806 = vpop.f32.mrf.mxu0
    %v807 = vpop.f32.mrf.mxu0
    %v808 = vadd.f32 %v759, %v807
    %v809 = vpop.f32.mrf.mxu0
    %810 = vdwg.mxu0
    %811 = vmatprep.subr.bf16.mxu0 0
    %812 = vmatpush1.bf16.msra.mxu0 %v607
    %813 = vmatprep.subr.bf16.mxu0 0
    %814 = vmatpush1.bf16.msra.mxu0 %v606
    %815 = vmatprep.subr.bf16.mxu0 0
    %816 = vmatpush1.bf16.msra.mxu0 %v605
    %817 = vmatprep.subr.bf16.mxu0 0
    %818 = vmatpush1.bf16.msra.mxu0 %v604
    %819 = vmatprep.subr.bf16.mxu0 0
    %820 = vmatpush1.bf16.msra.mxu0 %v603
    %821 = vmatprep.subr.bf16.mxu0 0
    %822 = vmatpush1.bf16.msra.mxu0 %v602
    %823 = vmatprep.subr.bf16.mxu0 0
    %824 = vmatpush1.bf16.msra.mxu0 %v601
    %825 = vmatprep.subr.bf16.mxu0 0
    %826 = vmatpush1.bf16.msra.mxu0 %v600
    %827 = vmatprep.subr.bf16.mxu0 0
    %828 = vmatpush2.bf16.msra.mxu0 %v615
    %829 = vmatprep.subr.bf16.mxu0 0
    %830 = vmatpush2.bf16.msra.mxu0 %v614
    %831 = vmatprep.subr.bf16.mxu0 0
    %832 = vmatpush2.bf16.msra.mxu0 %v613
    %833 = vmatprep.subr.bf16.mxu0 0
    %834 = vmatpush2.bf16.msra.mxu0 %v612
    %835 = vmatprep.subr.bf16.mxu0 0
    %836 = vmatpush2.bf16.msra.mxu0 %v611
    %837 = vmatprep.subr.bf16.mxu0 0
    %838 = vmatpush2.bf16.msra.mxu0 %v610
    %839 = vmatprep.subr.bf16.mxu0 0
    %840 = vmatpush2.bf16.msra.mxu0 %v609
    %841 = vmatprep.subr.bf16.mxu0 0
    %842 = vmatpush2.bf16.msra.mxu0 %v608
    %843 = vmatprep.mubr.bf16.mxu0 %v263
    %844 = vmatmul.mubr.bf16.gmra.mxu0 %v262
    %v845 = vpop.f32.mrf.mxu0
    %v846 = vadd.f32 %v797, %v845
    %v847 = vpop.f32.mrf.mxu0
    %v848 = vpop.f32.mrf.mxu0
    %v849 = vadd.f32 %v800, %v848
    %v850 = vpop.f32.mrf.mxu0
    %851 = vmatprep.mubr.bf16.mxu0 %v272
    %852 = vmatmul.mubr.bf16.gmra.mxu0 %v271
    %v853 = vpop.f32.mrf.mxu0
    %v854 = vadd.f32 %v805, %v853
    %v855 = vpop.f32.mrf.mxu0
    %v856 = vpop.f32.mrf.mxu0
    %v857 = vadd.f32 %v808, %v856
    %v858 = vpop.f32.mrf.mxu0
    %859 = vdwg.mxu0
    %860 = vmatprep.subr.bf16.mxu0 0
    %861 = vmatpush1.bf16.msra.mxu0 %v623
    %862 = vmatprep.subr.bf16.mxu0 0
    %863 = vmatpush1.bf16.msra.mxu0 %v622
    %864 = vmatprep.subr.bf16.mxu0 0
    %865 = vmatpush1.bf16.msra.mxu0 %v621
    %866 = vmatprep.subr.bf16.mxu0 0
    %867 = vmatpush1.bf16.msra.mxu0 %v620
    %868 = vmatprep.subr.bf16.mxu0 0
    %869 = vmatpush1.bf16.msra.mxu0 %v619
    %870 = vmatprep.subr.bf16.mxu0 0
    %871 = vmatpush1.bf16.msra.mxu0 %v618
    %872 = vmatprep.subr.bf16.mxu0 0
    %873 = vmatpush1.bf16.msra.mxu0 %v617
    %874 = vmatprep.subr.bf16.mxu0 0
    %875 = vmatpush1.bf16.msra.mxu0 %v616
    %876 = vmatprep.subr.bf16.mxu0 0
    %877 = vmatpush2.bf16.msra.mxu0 %v631
    %878 = vmatprep.subr.bf16.mxu0 0
    %879 = vmatpush2.bf16.msra.mxu0 %v630
    %880 = vmatprep.subr.bf16.mxu0 0
    %881 = vmatpush2.bf16.msra.mxu0 %v629
    %882 = vmatprep.subr.bf16.mxu0 0
    %883 = vmatpush2.bf16.msra.mxu0 %v628
    %884 = vmatprep.subr.bf16.mxu0 0
    %885 = vmatpush2.bf16.msra.mxu0 %v627
    %886 = vmatprep.subr.bf16.mxu0 0
    %887 = vmatpush2.bf16.msra.mxu0 %v626
    %888 = vmatprep.subr.bf16.mxu0 0
    %889 = vmatpush2.bf16.msra.mxu0 %v625
    %890 = vmatprep.subr.bf16.mxu0 0
    %891 = vmatpush2.bf16.msra.mxu0 %v624
    %892 = vmatprep.mubr.bf16.mxu0 %v265
    %893 = vmatmul.mubr.bf16.gmra.mxu0 %v264
    %v894 = vpop.f32.mrf.mxu0
    %v895 = vadd.f32 %v846, %v894
    %v896 = vpop.f32.mrf.mxu0
    %v897 = vpop.f32.mrf.mxu0
    %v898 = vadd.f32 %v849, %v897
    %v899 = vpop.f32.mrf.mxu0
    %900 = vmatprep.mubr.bf16.mxu0 %v274
    %901 = vmatmul.mubr.bf16.gmra.mxu0 %v273
    %v902 = vpop.f32.mrf.mxu0
    %v903 = vadd.f32 %v854, %v902
    %v904 = vpop.f32.mrf.mxu0
    %v905 = vpop.f32.mrf.mxu0
    %v906 = vadd.f32 %v857, %v905
    %v907 = vpop.f32.mrf.mxu0
    %908 = vdwg.mxu0
    %909 = vmatprep.subr.bf16.mxu0 0
    %910 = vmatpush1.bf16.msra.mxu0 0
    %911 = vmatprep.subr.bf16.mxu0 0
    %912 = vmatpush1.bf16.msra.mxu0 0
    %913 = vmatprep.subr.bf16.mxu0 0
    %914 = vmatpush1.bf16.msra.mxu0 0
    %915 = vmatprep.subr.bf16.mxu0 0
    %916 = vmatpush1.bf16.msra.mxu0 %v636
    %917 = vmatprep.subr.bf16.mxu0 0
    %918 = vmatpush1.bf16.msra.mxu0 %v635
    %919 = vmatprep.subr.bf16.mxu0 0
    %920 = vmatpush1.bf16.msra.mxu0 %v634
    %921 = vmatprep.subr.bf16.mxu0 0
    %922 = vmatpush1.bf16.msra.mxu0 %v633
    %923 = vmatprep.subr.bf16.mxu0 0
    %924 = vmatpush1.bf16.msra.mxu0 %v632
    %925 = vmatprep.subr.bf16.mxu0 0
    %926 = vmatpush2.bf16.msra.mxu0 0
    %927 = vmatprep.subr.bf16.mxu0 0
    %928 = vmatpush2.bf16.msra.mxu0 0
    %929 = vmatprep.subr.bf16.mxu0 0
    %930 = vmatpush2.bf16.msra.mxu0 0
    %931 = vmatprep.subr.bf16.mxu0 0
    %932 = vmatpush2.bf16.msra.mxu0 0
    %933 = vmatprep.subr.bf16.mxu0 0
    %934 = vmatpush2.bf16.msra.mxu0 0
    %935 = vmatprep.subr.bf16.mxu0 0
    %936 = vmatpush2.bf16.msra.mxu0 0
    %937 = vmatprep.subr.bf16.mxu0 0
    %938 = vmatpush2.bf16.msra.mxu0 0
    %939 = vmatprep.subr.bf16.mxu0 0
    %940 = vmatpush2.bf16.msra.mxu0 0
    %941 = vmatprep.mubr.bf16.mxu0 0
    %942 = vmatmul.mubr.bf16.gmra.mxu0 %v708
    %v943 = vpop.f32.mrf.mxu0
    %v944 = vadd.f32 %v895, %v943
    %v945 = vpop.f32.mrf.mxu0
    %v946 = vpop.f32.mrf.mxu0
    %v947 = vadd.f32 %v898, %v946
    %v948 = vpop.f32.mrf.mxu0
    %949 = vmatprep.mubr.bf16.mxu0 0
    %950 = vmatmul.mubr.bf16.gmra.mxu0 %v711
    %v951 = vpop.f32.mrf.mxu0
    %v952 = vadd.f32 %v903, %v951
    %v953 = vpop.f32.mrf.mxu0
    %v954 = vpop.f32.mrf.mxu0
    %v955 = vadd.f32 %v906, %v954
    %v956 = vpop.f32.mrf.mxu0
    %957 = vdwg.mxu0
    %v958 = vld [vmem:[%s1] sm:$0xff]
    %v959 = vld [vmem:[%s1 + $0x8] sm:$0xff]
    %v960 = vld [vmem:[%s1 + $0x10] sm:$0xff]
    %v961 = vld [vmem:[%s1 + $0x18] sm:$0xff]
    %v962 = vld [vmem:[%s1 + $0x20] sm:$0xf]
    %v963 = vld [vmem:[%s1 + $0x24] sm:$0xff]
    %v964 = vld [vmem:[%s1 + $0x2c] sm:$0xff]
    %v965 = vld [vmem:[%s1 + $0x34] sm:$0xff]
    %v966 = vld [vmem:[%s1 + $0x3c] sm:$0xff]
    %v967 = vld [vmem:[%s1 + $0x44] sm:$0xf]
    %v968 = vld [vmem:[%s1 + $0x48] sm:$0xff]
    %v969 = vld [vmem:[%s1 + $0x50] sm:$0xff]
    %v970 = vld [vmem:[%s1 + $0x58] sm:$0xff]
    %v971 = vld [vmem:[%s1 + $0x60] sm:$0xff]
    %v972 = vld [vmem:[%s1 + $0x68] sm:$0xf]
    %v973 = vld [vmem:[%s1 + $0x6c] sm:$0xff]
    %v974 = vld [vmem:[%s1 + $0x74] sm:$0xff]
    %v975 = vld [vmem:[%s1 + $0x7c] sm:$0xff]
    %v976 = vld [vmem:[%s1 + $0x84] sm:$0xff]
    %v977 = vld [vmem:[%s1 + $0x8c] sm:$0xf]
    %v998 = vunpack.c.l.b16 %v958
    %v999 = vunpack.c.h.b16 %v958
    %v1000 = vunpack.c.l.b16 %v959
    %v1001 = vunpack.c.h.b16 %v959
    %v1002 = vunpack.c.l.b16 %v960
    %v1003 = vunpack.c.h.b16 %v960
    %v1004 = vunpack.c.l.b16 %v961
    %v1005 = vunpack.c.h.b16 %v961
    %v1006 = vunpack.c.l.b16 %v962
    %v1007 = vunpack.c.l.b16 %v963
    %v1008 = vunpack.c.h.b16 %v963
    %v1009 = vunpack.c.l.b16 %v964
    %v1010 = vunpack.c.h.b16 %v964
    %v1011 = vunpack.c.l.b16 %v965
    %v1012 = vunpack.c.h.b16 %v965
    %v1013 = vunpack.c.l.b16 %v966
    %v1014 = vunpack.c.h.b16 %v966
    %v1015 = vunpack.c.l.b16 %v967
    %v1016 = vunpack.c.l.b16 %v968
    %v1017 = vunpack.c.h.b16 %v968
    %v1018 = vunpack.c.l.b16 %v969
    %v1019 = vunpack.c.h.b16 %v969
    %v1020 = vunpack.c.l.b16 %v970
    %v1021 = vunpack.c.h.b16 %v970
    %v1022 = vunpack.c.l.b16 %v971
    %v1023 = vunpack.c.h.b16 %v971
    %v1024 = vunpack.c.l.b16 %v972
    %v1025 = vunpack.c.l.b16 %v973
    %v1026 = vunpack.c.h.b16 %v973
    %v1027 = vunpack.c.l.b16 %v974
    %v1028 = vunpack.c.h.b16 %v974
    %v1029 = vunpack.c.l.b16 %v975
    %v1030 = vunpack.c.h.b16 %v975
    %v1031 = vunpack.c.l.b16 %v976
    %v1032 = vunpack.c.h.b16 %v976
    %v1033 = vunpack.c.l.b16 %v977
    %v1034 = vpack.c.b16 %v1007, %v998
    %v1035 = vpack.c.b16 %v1008, %v999
    %v1036 = vpack.c.b16 %v1009, %v1000
    %v1037 = vpack.c.b16 %v1010, %v1001
    %v1038 = vpack.c.b16 %v1011, %v1002
    %v1039 = vpack.c.b16 %v1012, %v1003
    %v1040 = vpack.c.b16 %v1013, %v1004
    %v1041 = vpack.c.b16 %v1014, %v1005
    %v1042 = vpack.c.b16 %v1015, %v1006
    %v1043 = vpack.c.b16 %v1025, %v1016
    %v1044 = vpack.c.b16 %v1026, %v1017
    %v1045 = vpack.c.b16 %v1027, %v1018
    %v1046 = vpack.c.b16 %v1028, %v1019
    %v1047 = vpack.c.b16 %v1029, %v1020
    %v1048 = vpack.c.b16 %v1030, %v1021
    %v1049 = vpack.c.b16 %v1031, %v1022
    %v1050 = vpack.c.b16 %v1032, %v1023
    %v1051 = vpack.c.b16 %v1033, %v1024
    %v1069 = vsel %vm706, %v1042, 0
    %v1072 = vsel %vm706, %v1051, 0
    %1074 = vmatprep.subr.bf16.mxu0 0
    %1075 = vmatpush1.bf16.msra.mxu0 %v575
    %1076 = vmatprep.subr.bf16.mxu0 0
    %1077 = vmatpush1.bf16.msra.mxu0 %v574
    %1078 = vmatprep.subr.bf16.mxu0 0
    %1079 = vmatpush1.bf16.msra.mxu0 %v573
    %1080 = vmatprep.subr.bf16.mxu0 0
    %1081 = vmatpush1.bf16.msra.mxu0 %v572
    %1082 = vmatprep.subr.bf16.mxu0 0
    %1083 = vmatpush1.bf16.msra.mxu0 %v571
    %1084 = vmatprep.subr.bf16.mxu0 0
    %1085 = vmatpush1.bf16.msra.mxu0 %v570
    %1086 = vmatprep.subr.bf16.mxu0 0
    %1087 = vmatpush1.bf16.msra.mxu0 %v569
    %1088 = vmatprep.subr.bf16.mxu0 0
    %1089 = vmatpush1.bf16.msra.mxu0 %v568
    %1090 = vmatprep.subr.bf16.mxu0 0
    %1091 = vmatpush2.bf16.msra.mxu0 %v583
    %1092 = vmatprep.subr.bf16.mxu0 0
    %1093 = vmatpush2.bf16.msra.mxu0 %v582
    %1094 = vmatprep.subr.bf16.mxu0 0
    %1095 = vmatpush2.bf16.msra.mxu0 %v581
    %1096 = vmatprep.subr.bf16.mxu0 0
    %1097 = vmatpush2.bf16.msra.mxu0 %v580
    %1098 = vmatprep.subr.bf16.mxu0 0
    %1099 = vmatpush2.bf16.msra.mxu0 %v579
    %1100 = vmatprep.subr.bf16.mxu0 0
    %1101 = vmatpush2.bf16.msra.mxu0 %v578
    %1102 = vmatprep.subr.bf16.mxu0 0
    %1103 = vmatpush2.bf16.msra.mxu0 %v577
    %1104 = vmatprep.subr.bf16.mxu0 0
    %1105 = vmatpush2.bf16.msra.mxu0 %v576
    %1106 = vmatprep.mubr.bf16.mxu0 %v1035
    %1107 = vmatmul.mubr.bf16.gmra.mxu0 %v1034
    %v1108 = vpop.f32.mrf.mxu0
    %v1109 = vadd.f32 %v200, %v1108
    %v1110 = vpop.f32.mrf.mxu0
    %v1111 = vpop.f32.mrf.mxu0
    %v1112 = vadd.f32 %v200, %v1111
    %v1113 = vpop.f32.mrf.mxu0
    %1114 = vmatprep.mubr.bf16.mxu0 %v1044
    %1115 = vmatmul.mubr.bf16.gmra.mxu0 %v1043
    %v1116 = vpop.f32.mrf.mxu0
    %v1117 = vadd.f32 %v200, %v1116
    %v1118 = vpop.f32.mrf.mxu0
    %v1119 = vpop.f32.mrf.mxu0
    %v1120 = vadd.f32 %v200, %v1119
    %v1121 = vpop.f32.mrf.mxu0
    %1122 = vdwg.mxu0
    %1123 = vmatprep.subr.bf16.mxu0 0
    %1124 = vmatpush1.bf16.msra.mxu0 %v591
    %1125 = vmatprep.subr.bf16.mxu0 0
    %1126 = vmatpush1.bf16.msra.mxu0 %v590
    %1127 = vmatprep.subr.bf16.mxu0 0
    %1128 = vmatpush1.bf16.msra.mxu0 %v589
    %1129 = vmatprep.subr.bf16.mxu0 0
    %1130 = vmatpush1.bf16.msra.mxu0 %v588
    %1131 = vmatprep.subr.bf16.mxu0 0
    %1132 = vmatpush1.bf16.msra.mxu0 %v587
    %1133 = vmatprep.subr.bf16.mxu0 0
    %1134 = vmatpush1.bf16.msra.mxu0 %v586
    %1135 = vmatprep.subr.bf16.mxu0 0
    %1136 = vmatpush1.bf16.msra.mxu0 %v585
    %1137 = vmatprep.subr.bf16.mxu0 0
    %1138 = vmatpush1.bf16.msra.mxu0 %v584
    %1139 = vmatprep.subr.bf16.mxu0 0
    %1140 = vmatpush2.bf16.msra.mxu0 %v599
    %1141 = vmatprep.subr.bf16.mxu0 0
    %1142 = vmatpush2.bf16.msra.mxu0 %v598
    %1143 = vmatprep.subr.bf16.mxu0 0
    %1144 = vmatpush2.bf16.msra.mxu0 %v597
    %1145 = vmatprep.subr.bf16.mxu0 0
    %1146 = vmatpush2.bf16.msra.mxu0 %v596
    %1147 = vmatprep.subr.bf16.mxu0 0
    %1148 = vmatpush2.bf16.msra.mxu0 %v595
    %1149 = vmatprep.subr.bf16.mxu0 0
    %1150 = vmatpush2.bf16.msra.mxu0 %v594
    %1151 = vmatprep.subr.bf16.mxu0 0
    %1152 = vmatpush2.bf16.msra.mxu0 %v593
    %1153 = vmatprep.subr.bf16.mxu0 0
    %1154 = vmatpush2.bf16.msra.mxu0 %v592
    %1155 = vmatprep.mubr.bf16.mxu0 %v1037
    %1156 = vmatmul.mubr.bf16.gmra.mxu0 %v1036
    %v1157 = vpop.f32.mrf.mxu0
    %v1158 = vadd.f32 %v1109, %v1157
    %v1159 = vpop.f32.mrf.mxu0
    %v1160 = vpop.f32.mrf.mxu0
    %v1161 = vadd.f32 %v1112, %v1160
    %v1162 = vpop.f32.mrf.mxu0
    %1163 = vmatprep.mubr.bf16.mxu0 %v1046
    %1164 = vmatmul.mubr.bf16.gmra.mxu0 %v1045
    %v1165 = vpop.f32.mrf.mxu0
    %v1166 = vadd.f32 %v1117, %v1165
    %v1167 = vpop.f32.mrf.mxu0
    %v1168 = vpop.f32.mrf.mxu0
    %v1169 = vadd.f32 %v1120, %v1168
    %v1170 = vpop.f32.mrf.mxu0
    %1171 = vdwg.mxu0
    %1172 = vmatprep.subr.bf16.mxu0 0
    %1173 = vmatpush1.bf16.msra.mxu0 %v607
    %1174 = vmatprep.subr.bf16.mxu0 0
    %1175 = vmatpush1.bf16.msra.mxu0 %v606
    %1176 = vmatprep.subr.bf16.mxu0 0
    %1177 = vmatpush1.bf16.msra.mxu0 %v605
    %1178 = vmatprep.subr.bf16.mxu0 0
    %1179 = vmatpush1.bf16.msra.mxu0 %v604
    %1180 = vmatprep.subr.bf16.mxu0 0
    %1181 = vmatpush1.bf16.msra.mxu0 %v603
    %1182 = vmatprep.subr.bf16.mxu0 0
    %1183 = vmatpush1.bf16.msra.mxu0 %v602
    %1184 = vmatprep.subr.bf16.mxu0 0
    %1185 = vmatpush1.bf16.msra.mxu0 %v601
    %1186 = vmatprep.subr.bf16.mxu0 0
    %1187 = vmatpush1.bf16.msra.mxu0 %v600
    %1188 = vmatprep.subr.bf16.mxu0 0
    %1189 = vmatpush2.bf16.msra.mxu0 %v615
    %1190 = vmatprep.subr.bf16.mxu0 0
    %1191 = vmatpush2.bf16.msra.mxu0 %v614
    %1192 = vmatprep.subr.bf16.mxu0 0
    %1193 = vmatpush2.bf16.msra.mxu0 %v613
    %1194 = vmatprep.subr.bf16.mxu0 0
    %1195 = vmatpush2.bf16.msra.mxu0 %v612
    %1196 = vmatprep.subr.bf16.mxu0 0
    %1197 = vmatpush2.bf16.msra.mxu0 %v611
    %1198 = vmatprep.subr.bf16.mxu0 0
    %1199 = vmatpush2.bf16.msra.mxu0 %v610
    %1200 = vmatprep.subr.bf16.mxu0 0
    %1201 = vmatpush2.bf16.msra.mxu0 %v609
    %1202 = vmatprep.subr.bf16.mxu0 0
    %1203 = vmatpush2.bf16.msra.mxu0 %v608
    %1204 = vmatprep.mubr.bf16.mxu0 %v1039
    %1205 = vmatmul.mubr.bf16.gmra.mxu0 %v1038
    %v1206 = vpop.f32.mrf.mxu0
    %v1207 = vadd.f32 %v1158, %v1206
    %v1208 = vpop.f32.mrf.mxu0
    %v1209 = vpop.f32.mrf.mxu0
    %v1210 = vadd.f32 %v1161, %v1209
    %v1211 = vpop.f32.mrf.mxu0
    %1212 = vmatprep.mubr.bf16.mxu0 %v1048
    %1213 = vmatmul.mubr.bf16.gmra.mxu0 %v1047
    %v1214 = vpop.f32.mrf.mxu0
    %v1215 = vadd.f32 %v1166, %v1214
    %v1216 = vpop.f32.mrf.mxu0
    %v1217 = vpop.f32.mrf.mxu0
    %v1218 = vadd.f32 %v1169, %v1217
    %v1219 = vpop.f32.mrf.mxu0
    %1220 = vdwg.mxu0
    %1221 = vmatprep.subr.bf16.mxu0 0
    %1222 = vmatpush1.bf16.msra.mxu0 %v623
    %1223 = vmatprep.subr.bf16.mxu0 0
    %1224 = vmatpush1.bf16.msra.mxu0 %v622
    %1225 = vmatprep.subr.bf16.mxu0 0
    %1226 = vmatpush1.bf16.msra.mxu0 %v621
    %1227 = vmatprep.subr.bf16.mxu0 0
    %1228 = vmatpush1.bf16.msra.mxu0 %v620
    %1229 = vmatprep.subr.bf16.mxu0 0
    %1230 = vmatpush1.bf16.msra.mxu0 %v619
    %1231 = vmatprep.subr.bf16.mxu0 0
    %1232 = vmatpush1.bf16.msra.mxu0 %v618
    %1233 = vmatprep.subr.bf16.mxu0 0
    %1234 = vmatpush1.bf16.msra.mxu0 %v617
    %1235 = vmatprep.subr.bf16.mxu0 0
    %1236 = vmatpush1.bf16.msra.mxu0 %v616
    %1237 = vmatprep.subr.bf16.mxu0 0
    %1238 = vmatpush2.bf16.msra.mxu0 %v631
    %1239 = vmatprep.subr.bf16.mxu0 0
    %1240 = vmatpush2.bf16.msra.mxu0 %v630
    %1241 = vmatprep.subr.bf16.mxu0 0
    %1242 = vmatpush2.bf16.msra.mxu0 %v629
    %1243 = vmatprep.subr.bf16.mxu0 0
    %1244 = vmatpush2.bf16.msra.mxu0 %v628
    %1245 = vmatprep.subr.bf16.mxu0 0
    %1246 = vmatpush2.bf16.msra.mxu0 %v627
    %1247 = vmatprep.subr.bf16.mxu0 0
    %1248 = vmatpush2.bf16.msra.mxu0 %v626
    %1249 = vmatprep.subr.bf16.mxu0 0
    %1250 = vmatpush2.bf16.msra.mxu0 %v625
    %1251 = vmatprep.subr.bf16.mxu0 0
    %1252 = vmatpush2.bf16.msra.mxu0 %v624
    %1253 = vmatprep.mubr.bf16.mxu0 %v1041
    %1254 = vmatmul.mubr.bf16.gmra.mxu0 %v1040
    %v1255 = vpop.f32.mrf.mxu0
    %v1256 = vadd.f32 %v1207, %v1255
    %v1257 = vpop.f32.mrf.mxu0
    %v1258 = vpop.f32.mrf.mxu0
    %v1259 = vadd.f32 %v1210, %v1258
    %v1260 = vpop.f32.mrf.mxu0
    %1261 = vmatprep.mubr.bf16.mxu0 %v1050
    %1262 = vmatmul.mubr.bf16.gmra.mxu0 %v1049
    %v1263 = vpop.f32.mrf.mxu0
    %v1264 = vadd.f32 %v1215, %v1263
    %v1265 = vpop.f32.mrf.mxu0
    %v1266 = vpop.f32.mrf.mxu0
    %v1267 = vadd.f32 %v1218, %v1266
    %v1268 = vpop.f32.mrf.mxu0
    %1269 = vdwg.mxu0
    %1270 = vmatprep.subr.bf16.mxu0 0
    %1271 = vmatpush1.bf16.msra.mxu0 0
    %1272 = vmatprep.subr.bf16.mxu0 0
    %1273 = vmatpush1.bf16.msra.mxu0 0
    %1274 = vmatprep.subr.bf16.mxu0 0
    %1275 = vmatpush1.bf16.msra.mxu0 0
    %1276 = vmatprep.subr.bf16.mxu0 0
    %1277 = vmatpush1.bf16.msra.mxu0 %v636
    %1278 = vmatprep.subr.bf16.mxu0 0
    %1279 = vmatpush1.bf16.msra.mxu0 %v635
    %1280 = vmatprep.subr.bf16.mxu0 0
    %1281 = vmatpush1.bf16.msra.mxu0 %v634
    %1282 = vmatprep.subr.bf16.mxu0 0
    %1283 = vmatpush1.bf16.msra.mxu0 %v633
    %1284 = vmatprep.subr.bf16.mxu0 0
    %1285 = vmatpush1.bf16.msra.mxu0 %v632
    %1286 = vmatprep.subr.bf16.mxu0 0
    %1287 = vmatpush2.bf16.msra.mxu0 0
    %1288 = vmatprep.subr.bf16.mxu0 0
    %1289 = vmatpush2.bf16.msra.mxu0 0
    %1290 = vmatprep.subr.bf16.mxu0 0
    %1291 = vmatpush2.bf16.msra.mxu0 0
    %1292 = vmatprep.subr.bf16.mxu0 0
    %1293 = vmatpush2.bf16.msra.mxu0 0
    %1294 = vmatprep.subr.bf16.mxu0 0
    %1295 = vmatpush2.bf16.msra.mxu0 0
    %1296 = vmatprep.subr.bf16.mxu0 0
    %1297 = vmatpush2.bf16.msra.mxu0 0
    %1298 = vmatprep.subr.bf16.mxu0 0
    %1299 = vmatpush2.bf16.msra.mxu0 0
    %1300 = vmatprep.subr.bf16.mxu0 0
    %1301 = vmatpush2.bf16.msra.mxu0 0
    %1302 = vmatprep.mubr.bf16.mxu0 0
    %1303 = vmatmul.mubr.bf16.gmra.mxu0 %v1069
    %v1304 = vpop.f32.mrf.mxu0
    %v1305 = vadd.f32 %v1256, %v1304
    %v1306 = vpop.f32.mrf.mxu0
    %v1307 = vpop.f32.mrf.mxu0
    %v1308 = vadd.f32 %v1259, %v1307
    %v1309 = vpop.f32.mrf.mxu0
    %1310 = vmatprep.mubr.bf16.mxu0 0
    %1311 = vmatmul.mubr.bf16.gmra.mxu0 %v1072
    %v1312 = vpop.f32.mrf.mxu0
    %v1313 = vadd.f32 %v1264, %v1312
    %v1314 = vpop.f32.mrf.mxu0
    %v1315 = vpop.f32.mrf.mxu0
    %v1316 = vadd.f32 %v1267, %v1315
    %v1317 = vpop.f32.mrf.mxu0
    %1318 = vdwg.mxu0
    %v1319 = vld [vmem:[%s5] sm:$0xff]
    %v1320 = vld [vmem:[%s6] sm:$0xff]
    %v1321 = vld [vmem:[%s7] sm:$0x1]
    %vm1322 = vcmask 64512
    %v1324 = vsel %vm1322, %v1305, 0
    %v1327 = vsel %vm1322, %v1308, 0
    %v1330 = vsel %vm1322, %v1313, 0
    %v1333 = vsel %vm1322, %v1316, 0
    %1335 = vmatprep.subr.mxu0 0.0
    %1336 = vmatpush1.msra.mxu0 0.0
    %1337 = vmatprep.subr.mxu0 0.0
    %1338 = vmatpush1.msra.mxu0 0.0
    %1339 = vmatprep.subr.mxu0 0.0
    %1340 = vmatpush1.msra.mxu0 0.0
    %1341 = vmatprep.subr.mxu0 0.0
    %1342 = vmatpush1.msra.mxu0 0.0
    %1343 = vmatprep.subr.mxu0 0.0
    %1344 = vmatpush1.msra.mxu0 0.0
    %1345 = vmatprep.subr.mxu0 0.0
    %1346 = vmatpush1.msra.mxu0 0.0
    %1347 = vmatprep.subr.mxu0 0.0
    %1348 = vmatpush1.msra.mxu0 0.0
    %1349 = vmatprep.subr.mxu0 0.0
    %1350 = vmatpush1.msra.mxu0 0.0
    %1351 = vmatprep.subr.mxu0 0.0
    %1352 = vmatpush1.msra.mxu0 0.0
    %1353 = vmatprep.subr.mxu0 0.0
    %1354 = vmatpush1.msra.mxu0 0.0
    %1355 = vmatprep.subr.mxu0 0.0
    %1356 = vmatpush1.msra.mxu0 0.0
    %1357 = vmatprep.subr.mxu0 0.0
    %1358 = vmatpush1.msra.mxu0 0.0
    %1359 = vmatprep.subr.mxu0 0.0
    %1360 = vmatpush1.msra.mxu0 0.0
    %1361 = vmatprep.subr.mxu0 0.0
    %1362 = vmatpush1.msra.mxu0 0.0
    %1363 = vmatprep.subr.mxu0 0.0
    %1364 = vmatpush1.msra.mxu0 0.0
    %1365 = vmatprep.subr.mxu0 0.0
    %1366 = vmatpush1.msra.mxu0 %v1320
    %1367 = vmatprep.subr.mxu0 0.0
    %1368 = vmatpush2.msra.mxu0 0.0
    %1369 = vmatprep.subr.mxu0 0.0
    %1370 = vmatpush2.msra.mxu0 0.0
    %1371 = vmatprep.subr.mxu0 0.0
    %1372 = vmatpush2.msra.mxu0 0.0
    %1373 = vmatprep.subr.mxu0 0.0
    %1374 = vmatpush2.msra.mxu0 0.0
    %1375 = vmatprep.subr.mxu0 0.0
    %1376 = vmatpush2.msra.mxu0 0.0
    %1377 = vmatprep.subr.mxu0 0.0
    %1378 = vmatpush2.msra.mxu0 0.0
    %1379 = vmatprep.subr.mxu0 0.0
    %1380 = vmatpush2.msra.mxu0 0.0
    %1381 = vmatprep.subr.mxu0 0.0
    %1382 = vmatpush2.msra.mxu0 0.0
    %1383 = vmatprep.subr.mxu0 0.0
    %1384 = vmatpush2.msra.mxu0 0.0
    %1385 = vmatprep.subr.mxu0 0.0
    %1386 = vmatpush2.msra.mxu0 0.0
    %1387 = vmatprep.subr.mxu0 0.0
    %1388 = vmatpush2.msra.mxu0 0.0
    %1389 = vmatprep.subr.mxu0 0.0
    %1390 = vmatpush2.msra.mxu0 0.0
    %1391 = vmatprep.subr.mxu0 0.0
    %1392 = vmatpush2.msra.mxu0 0.0
    %1393 = vmatprep.subr.mxu0 0.0
    %1394 = vmatpush2.msra.mxu0 0.0
    %1395 = vmatprep.subr.mxu0 0.0
    %1396 = vmatpush2.msra.mxu0 0.0
    %1397 = vmatprep.subr.mxu0 0.0
    %1398 = vmatpush2.msra.mxu0 0.0
    %1399 = vmatprep.mubr.f32.mxu0 0.0
    %1400 = vmatmul.mubr.f32.gmra.mxu0 %v1324
    %v1401 = vpop.f32.mrf.mxu0
    %v1402 = vadd.f32 0.0, %v1401
    %v1403 = vpop.f32.mrf.mxu0
    %1404 = vmatprep.mubr.f32.mxu0 0.0
    %1405 = vmatmul.mubr.f32.gmra.mxu0 %v1327
    %v1406 = vpop.f32.mrf.mxu0
    %v1407 = vadd.f32 0.0, %v1406
    %v1408 = vpop.f32.mrf.mxu0
    %1409 = vmatprep.mubr.f32.mxu0 0.0
    %1410 = vmatmul.mubr.f32.gmra.mxu0 %v1330
    %v1411 = vpop.f32.mrf.mxu0
    %v1412 = vadd.f32 0.0, %v1411
    %v1413 = vpop.f32.mrf.mxu0
    %1414 = vmatprep.mubr.f32.mxu0 0.0
    %1415 = vmatmul.mubr.f32.gmra.mxu0 %v1333
    %v1416 = vpop.f32.mrf.mxu0
    %v1417 = vadd.f32 0.0, %v1416
    %v1418 = vpop.f32.mrf.mxu0
    %1419 = vdwg.mxu0
    %v1421 = vsel %vm1322, %v944, 0
    %v1424 = vsel %vm1322, %v947, 0
    %v1427 = vsel %vm1322, %v952, 0
    %v1430 = vsel %vm1322, %v955, 0
    %1432 = vmatprep.subr.mxu0 0.0
    %1433 = vmatpush1.msra.mxu0 0.0
    %1434 = vmatprep.subr.mxu0 0.0
    %1435 = vmatpush1.msra.mxu0 0.0
    %1436 = vmatprep.subr.mxu0 0.0
    %1437 = vmatpush1.msra.mxu0 0.0
    %1438 = vmatprep.subr.mxu0 0.0
    %1439 = vmatpush1.msra.mxu0 0.0
    %1440 = vmatprep.subr.mxu0 0.0
    %1441 = vmatpush1.msra.mxu0 0.0
    %1442 = vmatprep.subr.mxu0 0.0
    %1443 = vmatpush1.msra.mxu0 0.0
    %1444 = vmatprep.subr.mxu0 0.0
    %1445 = vmatpush1.msra.mxu0 0.0
    %1446 = vmatprep.subr.mxu0 0.0
    %1447 = vmatpush1.msra.mxu0 0.0
    %1448 = vmatprep.subr.mxu0 0.0
    %1449 = vmatpush1.msra.mxu0 0.0
    %1450 = vmatprep.subr.mxu0 0.0
    %1451 = vmatpush1.msra.mxu0 0.0
    %1452 = vmatprep.subr.mxu0 0.0
    %1453 = vmatpush1.msra.mxu0 0.0
    %1454 = vmatprep.subr.mxu0 0.0
    %1455 = vmatpush1.msra.mxu0 0.0
    %1456 = vmatprep.subr.mxu0 0.0
    %1457 = vmatpush1.msra.mxu0 0.0
    %1458 = vmatprep.subr.mxu0 0.0
    %1459 = vmatpush1.msra.mxu0 0.0
    %1460 = vmatprep.subr.mxu0 0.0
    %1461 = vmatpush1.msra.mxu0 0.0
    %1462 = vmatprep.subr.mxu0 0.0
    %1463 = vmatpush1.msra.mxu0 %v1319
    %1464 = vmatprep.subr.mxu0 0.0
    %1465 = vmatpush2.msra.mxu0 0.0
    %1466 = vmatprep.subr.mxu0 0.0
    %1467 = vmatpush2.msra.mxu0 0.0
    %1468 = vmatprep.subr.mxu0 0.0
    %1469 = vmatpush2.msra.mxu0 0.0
    %1470 = vmatprep.subr.mxu0 0.0
    %1471 = vmatpush2.msra.mxu0 0.0
    %1472 = vmatprep.subr.mxu0 0.0
    %1473 = vmatpush2.msra.mxu0 0.0
    %1474 = vmatprep.subr.mxu0 0.0
    %1475 = vmatpush2.msra.mxu0 0.0
    %1476 = vmatprep.subr.mxu0 0.0
    %1477 = vmatpush2.msra.mxu0 0.0
    %1478 = vmatprep.subr.mxu0 0.0
    %1479 = vmatpush2.msra.mxu0 0.0
    %1480 = vmatprep.subr.mxu0 0.0
    %1481 = vmatpush2.msra.mxu0 0.0
    %1482 = vmatprep.subr.mxu0 0.0
    %1483 = vmatpush2.msra.mxu0 0.0
    %1484 = vmatprep.subr.mxu0 0.0
    %1485 = vmatpush2.msra.mxu0 0.0
    %1486 = vmatprep.subr.mxu0 0.0
    %1487 = vmatpush2.msra.mxu0 0.0
    %1488 = vmatprep.subr.mxu0 0.0
    %1489 = vmatpush2.msra.mxu0 0.0
    %1490 = vmatprep.subr.mxu0 0.0
    %1491 = vmatpush2.msra.mxu0 0.0
    %1492 = vmatprep.subr.mxu0 0.0
    %1493 = vmatpush2.msra.mxu0 0.0
    %1494 = vmatprep.subr.mxu0 0.0
    %1495 = vmatpush2.msra.mxu0 0.0
    %1496 = vmatprep.mubr.f32.mxu0 0.0
    %1497 = vmatmul.mubr.f32.gmra.mxu0 %v1421
    %v1498 = vpop.f32.mrf.mxu0
    %v1499 = vadd.f32 %v1402, %v1498
    %v1500 = vpop.f32.mrf.mxu0
    %1501 = vmatprep.mubr.f32.mxu0 0.0
    %1502 = vmatmul.mubr.f32.gmra.mxu0 %v1424
    %v1503 = vpop.f32.mrf.mxu0
    %v1504 = vadd.f32 %v1407, %v1503
    %v1505 = vpop.f32.mrf.mxu0
    %1506 = vmatprep.mubr.f32.mxu0 0.0
    %1507 = vmatmul.mubr.f32.gmra.mxu0 %v1427
    %v1508 = vpop.f32.mrf.mxu0
    %v1509 = vadd.f32 %v1412, %v1508
    %v1510 = vpop.f32.mrf.mxu0
    %1511 = vmatprep.mubr.f32.mxu0 0.0
    %1512 = vmatmul.mubr.f32.gmra.mxu0 %v1430
    %v1513 = vpop.f32.mrf.mxu0
    %v1514 = vadd.f32 %v1417, %v1513
    %v1515 = vpop.f32.mrf.mxu0
    %1516 = vdwg.mxu0
    %v1518 = vlaneseq
    %v1519 = vshrl.u32 %v1518, 7
    %v1520 = vsub.s32 0, %v1519
    %v1521 = vrot.slane %v1321, %v1520
    %v1523 = vadd.f32 %v1499, %v1521
    %v1524 = vadd.f32 %v1504, %v1521
    %v1525 = vadd.f32 %v1509, %v1521
    %v1526 = vadd.f32 %v1514, %v1521
    %v1528 = vsel %vm1322, %v1523, 0
    %v1531 = vsel %vm1322, %v1524, 0
    %v1534 = vsel %vm1322, %v1525, 0
    %v1537 = vsel %vm1322, %v1526, 0
    %1539 = vmatprep.subr.mxu0 0.0
    %1540 = vmatpush1.msra.mxu0 0.0
    %1541 = vmatprep.subr.mxu0 0.0
    %1542 = vmatpush1.msra.mxu0 0.0
    %1543 = vmatprep.subr.mxu0 0.0
    %1544 = vmatpush1.msra.mxu0 0.0
    %1545 = vmatprep.subr.mxu0 0.0
    %1546 = vmatpush1.msra.mxu0 0.0
    %1547 = vmatprep.subr.mxu0 0.0
    %1548 = vmatpush1.msra.mxu0 0.0
    %1549 = vmatprep.subr.mxu0 0.0
    %1550 = vmatpush1.msra.mxu0 0.0
    %1551 = vmatprep.subr.mxu0 0.0
    %1552 = vmatpush1.msra.mxu0 0.0
    %1553 = vmatprep.subr.mxu0 0.0
    %1554 = vmatpush1.msra.mxu0 0.0
    %1555 = vmatprep.subr.mxu0 0.0
    %1556 = vmatpush1.msra.mxu0 0.0
    %1557 = vmatprep.subr.mxu0 0.0
    %1558 = vmatpush1.msra.mxu0 0.0
    %1559 = vmatprep.subr.mxu0 0.0
    %1560 = vmatpush1.msra.mxu0 0.0
    %1561 = vmatprep.subr.mxu0 0.0
    %1562 = vmatpush1.msra.mxu0 0.0
    %1563 = vmatprep.subr.mxu0 0.0
    %1564 = vmatpush1.msra.mxu0 0.0
    %1565 = vmatprep.subr.mxu0 0.0
    %1566 = vmatpush1.msra.mxu0 0.0
    %1567 = vmatprep.subr.mxu0 0.0
    %1568 = vmatpush1.msra.mxu0 0.0
    %1569 = vmatprep.subr.mxu0 0.0
    %1570 = vmatpush1.msra.mxu0 %v1320
    %1571 = vmatprep.subr.mxu0 0.0
    %1572 = vmatpush2.msra.mxu0 0.0
    %1573 = vmatprep.subr.mxu0 0.0
    %1574 = vmatpush2.msra.mxu0 0.0
    %1575 = vmatprep.subr.mxu0 0.0
    %1576 = vmatpush2.msra.mxu0 0.0
    %1577 = vmatprep.subr.mxu0 0.0
    %1578 = vmatpush2.msra.mxu0 0.0
    %1579 = vmatprep.subr.mxu0 0.0
    %1580 = vmatpush2.msra.mxu0 0.0
    %1581 = vmatprep.subr.mxu0 0.0
    %1582 = vmatpush2.msra.mxu0 0.0
    %1583 = vmatprep.subr.mxu0 0.0
    %1584 = vmatpush2.msra.mxu0 0.0
    %1585 = vmatprep.subr.mxu0 0.0
    %1586 = vmatpush2.msra.mxu0 0.0
    %1587 = vmatprep.subr.mxu0 0.0
    %1588 = vmatpush2.msra.mxu0 0.0
    %1589 = vmatprep.subr.mxu0 0.0
    %1590 = vmatpush2.msra.mxu0 0.0
    %1591 = vmatprep.subr.mxu0 0.0
    %1592 = vmatpush2.msra.mxu0 0.0
    %1593 = vmatprep.subr.mxu0 0.0
    %1594 = vmatpush2.msra.mxu0 0.0
    %1595 = vmatprep.subr.mxu0 0.0
    %1596 = vmatpush2.msra.mxu0 0.0
    %1597 = vmatprep.subr.mxu0 0.0
    %1598 = vmatpush2.msra.mxu0 0.0
    %1599 = vmatprep.subr.mxu0 0.0
    %1600 = vmatpush2.msra.mxu0 0.0
    %1601 = vmatprep.subr.mxu0 0.0
    %1602 = vmatpush2.msra.mxu0 0.0
    %1603 = vmatprep.mubr.f32.mxu0 0.0
    %1604 = vmatmul.mubr.f32.gmra.mxu0 %v1528
    %v1605 = vpop.f32.mrf.mxu0
    %v1606 = vadd.f32 0.0, %v1605
    %v1607 = vpop.f32.mrf.mxu0
    %1608 = vmatprep.mubr.f32.mxu0 0.0
    %1609 = vmatmul.mubr.f32.gmra.mxu0 %v1531
    %v1610 = vpop.f32.mrf.mxu0
    %v1611 = vadd.f32 0.0, %v1610
    %v1612 = vpop.f32.mrf.mxu0
    %1613 = vmatprep.mubr.f32.mxu0 0.0
    %1614 = vmatmul.mubr.f32.gmra.mxu0 %v1534
    %v1615 = vpop.f32.mrf.mxu0
    %v1616 = vadd.f32 0.0, %v1615
    %v1617 = vpop.f32.mrf.mxu0
    %1618 = vmatprep.mubr.f32.mxu0 0.0
    %1619 = vmatmul.mubr.f32.gmra.mxu0 %v1537
    %v1620 = vpop.f32.mrf.mxu0
    %v1621 = vadd.f32 0.0, %v1620
    %v1622 = vpop.f32.mrf.mxu0
    %1623 = vdwg.mxu0
    %1624 = vmatprep.subr.mxu0 0.0
    %1625 = vmatpush1.msra.mxu0 0.0
    %1626 = vmatprep.subr.mxu0 0.0
    %1627 = vmatpush1.msra.mxu0 0.0
    %1628 = vmatprep.subr.mxu0 0.0
    %1629 = vmatpush1.msra.mxu0 0.0
    %1630 = vmatprep.subr.mxu0 0.0
    %1631 = vmatpush1.msra.mxu0 0.0
    %1632 = vmatprep.subr.mxu0 0.0
    %1633 = vmatpush1.msra.mxu0 0.0
    %1634 = vmatprep.subr.mxu0 0.0
    %1635 = vmatpush1.msra.mxu0 0.0
    %1636 = vmatprep.subr.mxu0 0.0
    %1637 = vmatpush1.msra.mxu0 0.0
    %1638 = vmatprep.subr.mxu0 0.0
    %1639 = vmatpush1.msra.mxu0 0.0
    %1640 = vmatprep.subr.mxu0 0.0
    %1641 = vmatpush1.msra.mxu0 0.0
    %1642 = vmatprep.subr.mxu0 0.0
    %1643 = vmatpush1.msra.mxu0 0.0
    %1644 = vmatprep.subr.mxu0 0.0
    %1645 = vmatpush1.msra.mxu0 0.0
    %1646 = vmatprep.subr.mxu0 0.0
    %1647 = vmatpush1.msra.mxu0 0.0
    %1648 = vmatprep.subr.mxu0 0.0
    %1649 = vmatpush1.msra.mxu0 0.0
    %1650 = vmatprep.subr.mxu0 0.0
    %1651 = vmatpush1.msra.mxu0 0.0
    %1652 = vmatprep.subr.mxu0 0.0
    %1653 = vmatpush1.msra.mxu0 0.0
    %1654 = vmatprep.subr.mxu0 0.0
    %1655 = vmatpush1.msra.mxu0 %v1319
    %1656 = vmatprep.subr.mxu0 0.0
    %1657 = vmatpush2.msra.mxu0 0.0
    %1658 = vmatprep.subr.mxu0 0.0
    %1659 = vmatpush2.msra.mxu0 0.0
    %1660 = vmatprep.subr.mxu0 0.0
    %1661 = vmatpush2.msra.mxu0 0.0
    %1662 = vmatprep.subr.mxu0 0.0
    %1663 = vmatpush2.msra.mxu0 0.0
    %1664 = vmatprep.subr.mxu0 0.0
    %1665 = vmatpush2.msra.mxu0 0.0
    %1666 = vmatprep.subr.mxu0 0.0
    %1667 = vmatpush2.msra.mxu0 0.0
    %1668 = vmatprep.subr.mxu0 0.0
    %1669 = vmatpush2.msra.mxu0 0.0
    %1670 = vmatprep.subr.mxu0 0.0
    %1671 = vmatpush2.msra.mxu0 0.0
    %1672 = vmatprep.subr.mxu0 0.0
    %1673 = vmatpush2.msra.mxu0 0.0
    %1674 = vmatprep.subr.mxu0 0.0
    %1675 = vmatpush2.msra.mxu0 0.0
    %1676 = vmatprep.subr.mxu0 0.0
    %1677 = vmatpush2.msra.mxu0 0.0
    %1678 = vmatprep.subr.mxu0 0.0
    %1679 = vmatpush2.msra.mxu0 0.0
    %1680 = vmatprep.subr.mxu0 0.0
    %1681 = vmatpush2.msra.mxu0 0.0
    %1682 = vmatprep.subr.mxu0 0.0
    %1683 = vmatpush2.msra.mxu0 0.0
    %1684 = vmatprep.subr.mxu0 0.0
    %1685 = vmatpush2.msra.mxu0 0.0
    %1686 = vmatprep.subr.mxu0 0.0
    %1687 = vmatpush2.msra.mxu0 0.0
    %1688 = vmatprep.mubr.f32.mxu0 0.0
    %1689 = vmatmul.mubr.f32.gmra.mxu0 %v1324
    %v1690 = vpop.f32.mrf.mxu0
    %v1691 = vadd.f32 %v1606, %v1690
    %v1692 = vpop.f32.mrf.mxu0
    %1693 = vmatprep.mubr.f32.mxu0 0.0
    %1694 = vmatmul.mubr.f32.gmra.mxu0 %v1327
    %v1695 = vpop.f32.mrf.mxu0
    %v1696 = vadd.f32 %v1611, %v1695
    %v1697 = vpop.f32.mrf.mxu0
    %1698 = vmatprep.mubr.f32.mxu0 0.0
    %1699 = vmatmul.mubr.f32.gmra.mxu0 %v1330
    %v1700 = vpop.f32.mrf.mxu0
    %v1701 = vadd.f32 %v1616, %v1700
    %v1702 = vpop.f32.mrf.mxu0
    %1703 = vmatprep.mubr.f32.mxu0 0.0
    %1704 = vmatmul.mubr.f32.gmra.mxu0 %v1333
    %v1705 = vpop.f32.mrf.mxu0
    %v1706 = vadd.f32 %v1621, %v1705
    %v1707 = vpop.f32.mrf.mxu0
    %1708 = vdwg.mxu0
    %v1709 = vadd.f32 %v1691, %v1521
    %v1710 = vadd.f32 %v1696, %v1521
    %v1711 = vadd.f32 %v1701, %v1521
    %v1712 = vadd.f32 %v1706, %v1521
    %v1713 = vmax.f32 %v1709, -30.0
    %v1714 = vmax.f32 %v1710, -30.0
    %v1715 = vmax.f32 %v1711, -30.0
    %v1716 = vmax.f32 %v1712, -30.0
    %v1717 = vmin.f32 %v1713, 20.0
    %v1718 = vmin.f32 %v1714, 20.0
    %v1719 = vmin.f32 %v1715, 20.0
    %v1720 = vmin.f32 %v1716, 20.0
    %v1721 = vmul.f32 %v1717, 0.5
    %v1722 = vmul.f32 %v1718, 0.5
    %v1723 = vmul.f32 %v1719, 0.5
    %v1724 = vmul.f32 %v1720, 0.5
    %v1725 = vmul.f32 %v1721, 1.442695
    %v1726 = vpow.pop %v1725
    %v1727 = vmul.f32 %v1722, 1.442695
    %v1728 = vpow.pop %v1727
    %v1729 = vmul.f32 %v1723, 1.442695
    %v1730 = vpow.pop %v1729
    %v1731 = vmul.f32 %v1724, 1.442695
    %v1732 = vpow.pop %v1731
    %v1733 = vld [vmem:[%s2] sm:$0xff]
    %v1734 = vld [vmem:[%s2 + $0x8] sm:$0xff]
    %v1735 = vld [vmem:[%s2 + $0x10] sm:$0xff]
    %v1736 = vld [vmem:[%s2 + $0x18] sm:$0xff]
    %1741 = vrot.lane.b32.xlu0 %v1733, 4
    %v1742 = vpop.permute.xlu0 %1741
    %1743 = vrot.lane.b32.xlu0 %v1734, 4
    %v1744 = vpop.permute.xlu0 %1743
    %1745 = vrot.lane.b32.xlu0 %v1735, 4
    %v1746 = vpop.permute.xlu0 %1745
    %1747 = vrot.lane.b32.xlu0 %v1736, 4
    %v1748 = vpop.permute.xlu0 %1747
    %v1753 = vmul.f32 %v1726, %v1742
    %v1754 = vmul.f32 %v1728, %v1744
    %v1755 = vmul.f32 %v1730, %v1746
    %v1756 = vmul.f32 %v1732, %v1748
    %1761 = vrot.lane.b32.xlu0 %v1753, 124
    %v1762 = vpop.permute.xlu0 %1761
    %1763 = vrot.lane.b32.xlu0 %v1754, 124
    %v1764 = vpop.permute.xlu0 %1763
    %1765 = vrot.lane.b32.xlu0 %v1755, 124
    %v1766 = vpop.permute.xlu0 %1765
    %1767 = vrot.lane.b32.xlu0 %v1756, 124
    %v1768 = vpop.permute.xlu0 %1767
    %v1773 = vadd.f32 %v1709, %v1762
    %v1774 = vadd.f32 %v1710, %v1764
    %v1775 = vadd.f32 %v1711, %v1766
    %v1776 = vadd.f32 %v1712, %v1768
    %v1777 = vld [vmem:[%s8] sm:$0xff]
    %v1778 = vld [vmem:[%s8 + $0x8] sm:$0xff]
    %v1779 = vld [vmem:[%s8 + $0x10] sm:$0xff]
    %v1780 = vld [vmem:[%s8 + $0x18] sm:$0xff]
    %v1781 = vld [vmem:[%s8 + $0x20] sm:$0xf]
    %v1782 = vld [vmem:[%s9] sm:$0xff]
    %v1783 = vld [vmem:[%s9 + $0x8] sm:$0x1]
    %v1786 = vlaneseq
    %v1787 = vshrl.u32 %v1786, 7
    %v1788 = vsub.s32 0, %v1787
    %v1789 = vrot.slane %v1782, %v1788
    %v1790 = vlaneseq
    %v1791 = vshrl.u32 %v1790, 7
    %v1792 = vsub.s32 1, %v1791
    %v1793 = vrot.slane %v1782, %v1792
    %v1794 = vlaneseq
    %v1795 = vshrl.u32 %v1794, 7
    %v1796 = vsub.s32 2, %v1795
    %v1797 = vrot.slane %v1782, %v1796
    %v1798 = vlaneseq
    %v1799 = vshrl.u32 %v1798, 7
    %v1800 = vsub.s32 3, %v1799
    %v1801 = vrot.slane %v1782, %v1800
    %v1802 = vlaneseq
    %v1803 = vshrl.u32 %v1802, 7
    %v1804 = vsub.s32 4, %v1803
    %v1805 = vrot.slane %v1782, %v1804
    %v1806 = vlaneseq
    %v1807 = vshrl.u32 %v1806, 7
    %v1808 = vsub.s32 5, %v1807
    %v1809 = vrot.slane %v1782, %v1808
    %v1810 = vlaneseq
    %v1811 = vshrl.u32 %v1810, 7
    %v1812 = vsub.s32 6, %v1811
    %v1813 = vrot.slane %v1782, %v1812
    %v1814 = vlaneseq
    %v1815 = vshrl.u32 %v1814, 7
    %v1816 = vsub.s32 7, %v1815
    %v1817 = vrot.slane %v1782, %v1816
    %v1818 = vlaneseq
    %v1819 = vshrl.u32 %v1818, 7
    %v1820 = vsub.s32 0, %v1819
    %v1821 = vrot.slane %v1783, %v1820
    %v1836 = vcombine.high %v1777, %v1777
    %v1837 = vcombine.high %v1778, %v1778
    %v1838 = vcombine.high %v1779, %v1779
    %v1839 = vcombine.high %v1780, %v1780
    %vm1840 = vcmask 31744
    %v1842 = vsel %vm1840, %v1773, 0
    %v1845 = vsel %vm1840, %v1774, 0
    %v1848 = vsel %vm1840, %v1775, 0
    %v1851 = vsel %vm1840, %v1776, 0
    %vm1853 = vcmask 1043456
    %v1854 = vsel %vm1853, %v1777, 0
    %v1856 = vsel %vm1853, %v1836, 0
    %v1858 = vsel %vm1853, %v1778, 0
    %v1860 = vsel %vm1853, %v1837, 0
    %v1862 = vsel %vm1853, %v1779, 0
    %v1864 = vsel %vm1853, %v1838, 0
    %v1866 = vsel %vm1853, %v1780, 0
    %v1868 = vsel %vm1853, %v1839, 0
    %v1870 = vsel %vm1853, %v1781, 0
    %1872 = vmatprep.subr.mxu0 0.0
    %1873 = vmatpush1.msra.mxu0 0.0
    %1874 = vmatprep.subr.mxu0 0.0
    %1875 = vmatpush1.msra.mxu0 0.0
    %1876 = vmatprep.subr.mxu0 0.0
    %1877 = vmatpush1.msra.mxu0 0.0
    %1878 = vmatprep.subr.mxu0 0.0
    %1879 = vmatpush1.msra.mxu0 0.0
    %1880 = vmatprep.subr.mxu0 0.0
    %1881 = vmatpush1.msra.mxu0 0.0
    %1882 = vmatprep.subr.mxu0 0.0
    %1883 = vmatpush1.msra.mxu0 0.0
    %1884 = vmatprep.subr.mxu0 0.0
    %1885 = vmatpush1.msra.mxu0 0.0
    %1886 = vmatprep.subr.mxu0 0.0
    %1887 = vmatpush1.msra.mxu0 0.0
    %1888 = vmatprep.subr.mxu0 0.0
    %1889 = vmatpush1.msra.mxu0 0.0
    %1890 = vmatprep.subr.mxu0 0.0
    %1891 = vmatpush1.msra.mxu0 0.0
    %1892 = vmatprep.subr.mxu0 0.0
    %1893 = vmatpush1.msra.mxu0 0.0
    %1894 = vmatprep.subr.mxu0 0.0
    %1895 = vmatpush1.msra.mxu0 0.0
    %1896 = vmatprep.subr.mxu0 0.0
    %1897 = vmatpush1.msra.mxu0 0.0
    %1898 = vmatprep.subr.mxu0 0.0
    %1899 = vmatpush1.msra.mxu0 0.0
    %1900 = vmatprep.subr.mxu0 0.0
    %1901 = vmatpush1.msra.mxu0 0.0
    %1902 = vmatprep.subr.mxu0 %v1856
    %1903 = vmatpush1.msra.mxu0 %v1854
    %1904 = vmatprep.subr.mxu0 0.0
    %1905 = vmatpush2.msra.mxu0 0.0
    %1906 = vmatprep.subr.mxu0 0.0
    %1907 = vmatpush2.msra.mxu0 0.0
    %1908 = vmatprep.subr.mxu0 0.0
    %1909 = vmatpush2.msra.mxu0 0.0
    %1910 = vmatprep.subr.mxu0 0.0
    %1911 = vmatpush2.msra.mxu0 0.0
    %1912 = vmatprep.subr.mxu0 0.0
    %1913 = vmatpush2.msra.mxu0 0.0
    %1914 = vmatprep.subr.mxu0 0.0
    %1915 = vmatpush2.msra.mxu0 0.0
    %1916 = vmatprep.subr.mxu0 0.0
    %1917 = vmatpush2.msra.mxu0 0.0
    %1918 = vmatprep.subr.mxu0 0.0
    %1919 = vmatpush2.msra.mxu0 0.0
    %1920 = vmatprep.subr.mxu0 0.0
    %1921 = vmatpush2.msra.mxu0 0.0
    %1922 = vmatprep.subr.mxu0 0.0
    %1923 = vmatpush2.msra.mxu0 0.0
    %1924 = vmatprep.subr.mxu0 0.0
    %1925 = vmatpush2.msra.mxu0 0.0
    %1926 = vmatprep.subr.mxu0 0.0
    %1927 = vmatpush2.msra.mxu0 0.0
    %1928 = vmatprep.subr.mxu0 0.0
    %1929 = vmatpush2.msra.mxu0 0.0
    %1930 = vmatprep.subr.mxu0 0.0
    %1931 = vmatpush2.msra.mxu0 0.0
    %1932 = vmatprep.subr.mxu0 0.0
    %1933 = vmatpush2.msra.mxu0 0.0
    %1934 = vmatprep.subr.mxu0 0.0
    %1935 = vmatpush2.msra.mxu0 0.0
    %1936 = vmatprep.mubr.f32.mxu0 0.0
    %1937 = vmatmul.mubr.f32.gmra.mxu0 %v1842
    %v1938 = vpop.f32.mrf.mxu0
    %v1939 = vadd.f32 %v1789, %v1938
    %v1940 = vpop.f32.mrf.mxu0
    %v1941 = vadd.f32 %v1793, %v1940
    %1942 = vmatprep.mubr.f32.mxu0 0.0
    %1943 = vmatmul.mubr.f32.gmra.mxu0 %v1845
    %v1944 = vpop.f32.mrf.mxu0
    %v1945 = vadd.f32 %v1789, %v1944
    %v1946 = vpop.f32.mrf.mxu0
    %v1947 = vadd.f32 %v1793, %v1946
    %1948 = vmatprep.mubr.f32.mxu0 0.0
    %1949 = vmatmul.mubr.f32.gmra.mxu0 %v1848
    %v1950 = vpop.f32.mrf.mxu0
    %v1951 = vadd.f32 %v1789, %v1950
    %v1952 = vpop.f32.mrf.mxu0
    %v1953 = vadd.f32 %v1793, %v1952
    %1954 = vmatprep.mubr.f32.mxu0 0.0
    %1955 = vmatmul.mubr.f32.gmra.mxu0 %v1851
    %v1956 = vpop.f32.mrf.mxu0
    %v1957 = vadd.f32 %v1789, %v1956
    %v1958 = vpop.f32.mrf.mxu0
    %v1959 = vadd.f32 %v1793, %v1958
    %1960 = vdwg.mxu0
    %1961 = vmatprep.subr.mxu0 0.0
    %1962 = vmatpush1.msra.mxu0 0.0
    %1963 = vmatprep.subr.mxu0 0.0
    %1964 = vmatpush1.msra.mxu0 0.0
    %1965 = vmatprep.subr.mxu0 0.0
    %1966 = vmatpush1.msra.mxu0 0.0
    %1967 = vmatprep.subr.mxu0 0.0
    %1968 = vmatpush1.msra.mxu0 0.0
    %1969 = vmatprep.subr.mxu0 0.0
    %1970 = vmatpush1.msra.mxu0 0.0
    %1971 = vmatprep.subr.mxu0 0.0
    %1972 = vmatpush1.msra.mxu0 0.0
    %1973 = vmatprep.subr.mxu0 0.0
    %1974 = vmatpush1.msra.mxu0 0.0
    %1975 = vmatprep.subr.mxu0 0.0
    %1976 = vmatpush1.msra.mxu0 0.0
    %1977 = vmatprep.subr.mxu0 0.0
    %1978 = vmatpush1.msra.mxu0 0.0
    %1979 = vmatprep.subr.mxu0 0.0
    %1980 = vmatpush1.msra.mxu0 0.0
    %1981 = vmatprep.subr.mxu0 0.0
    %1982 = vmatpush1.msra.mxu0 0.0
    %1983 = vmatprep.subr.mxu0 0.0
    %1984 = vmatpush1.msra.mxu0 0.0
    %1985 = vmatprep.subr.mxu0 0.0
    %1986 = vmatpush1.msra.mxu0 0.0
    %1987 = vmatprep.subr.mxu0 0.0
    %1988 = vmatpush1.msra.mxu0 0.0
    %1989 = vmatprep.subr.mxu0 0.0
    %1990 = vmatpush1.msra.mxu0 0.0
    %1991 = vmatprep.subr.mxu0 %v1860
    %1992 = vmatpush1.msra.mxu0 %v1858
    %1993 = vmatprep.subr.mxu0 0.0
    %1994 = vmatpush2.msra.mxu0 0.0
    %1995 = vmatprep.subr.mxu0 0.0
    %1996 = vmatpush2.msra.mxu0 0.0
    %1997 = vmatprep.subr.mxu0 0.0
    %1998 = vmatpush2.msra.mxu0 0.0
    %1999 = vmatprep.subr.mxu0 0.0
    %2000 = vmatpush2.msra.mxu0 0.0
    %2001 = vmatprep.subr.mxu0 0.0
    %2002 = vmatpush2.msra.mxu0 0.0
    %2003 = vmatprep.subr.mxu0 0.0
    %2004 = vmatpush2.msra.mxu0 0.0
    %2005 = vmatprep.subr.mxu0 0.0
    %2006 = vmatpush2.msra.mxu0 0.0
    %2007 = vmatprep.subr.mxu0 0.0
    %2008 = vmatpush2.msra.mxu0 0.0
    %2009 = vmatprep.subr.mxu0 0.0
    %2010 = vmatpush2.msra.mxu0 0.0
    %2011 = vmatprep.subr.mxu0 0.0
    %2012 = vmatpush2.msra.mxu0 0.0
    %2013 = vmatprep.subr.mxu0 0.0
    %2014 = vmatpush2.msra.mxu0 0.0
    %2015 = vmatprep.subr.mxu0 0.0
    %2016 = vmatpush2.msra.mxu0 0.0
    %2017 = vmatprep.subr.mxu0 0.0
    %2018 = vmatpush2.msra.mxu0 0.0
    %2019 = vmatprep.subr.mxu0 0.0
    %2020 = vmatpush2.msra.mxu0 0.0
    %2021 = vmatprep.subr.mxu0 0.0
    %2022 = vmatpush2.msra.mxu0 0.0
    %2023 = vmatprep.subr.mxu0 0.0
    %2024 = vmatpush2.msra.mxu0 0.0
    %2025 = vmatprep.mubr.f32.mxu0 0.0
    %2026 = vmatmul.mubr.f32.gmra.mxu0 %v1842
    %v2027 = vpop.f32.mrf.mxu0
    %v2028 = vadd.f32 %v1797, %v2027
    %v2029 = vpop.f32.mrf.mxu0
    %v2030 = vadd.f32 %v1801, %v2029
    %2031 = vmatprep.mubr.f32.mxu0 0.0
    %2032 = vmatmul.mubr.f32.gmra.mxu0 %v1845
    %v2033 = vpop.f32.mrf.mxu0
    %v2034 = vadd.f32 %v1797, %v2033
    %v2035 = vpop.f32.mrf.mxu0
    %v2036 = vadd.f32 %v1801, %v2035
    %2037 = vmatprep.mubr.f32.mxu0 0.0
    %2038 = vmatmul.mubr.f32.gmra.mxu0 %v1848
    %v2039 = vpop.f32.mrf.mxu0
    %v2040 = vadd.f32 %v1797, %v2039
    %v2041 = vpop.f32.mrf.mxu0
    %v2042 = vadd.f32 %v1801, %v2041
    %2043 = vmatprep.mubr.f32.mxu0 0.0
    %2044 = vmatmul.mubr.f32.gmra.mxu0 %v1851
    %v2045 = vpop.f32.mrf.mxu0
    %v2046 = vadd.f32 %v1797, %v2045
    %v2047 = vpop.f32.mrf.mxu0
    %v2048 = vadd.f32 %v1801, %v2047
    %2049 = vdwg.mxu0
    %2050 = vmatprep.subr.mxu0 0.0
    %2051 = vmatpush1.msra.mxu0 0.0
    %2052 = vmatprep.subr.mxu0 0.0
    %2053 = vmatpush1.msra.mxu0 0.0
    %2054 = vmatprep.subr.mxu0 0.0
    %2055 = vmatpush1.msra.mxu0 0.0
    %2056 = vmatprep.subr.mxu0 0.0
    %2057 = vmatpush1.msra.mxu0 0.0
    %2058 = vmatprep.subr.mxu0 0.0
    %2059 = vmatpush1.msra.mxu0 0.0
    %2060 = vmatprep.subr.mxu0 0.0
    %2061 = vmatpush1.msra.mxu0 0.0
    %2062 = vmatprep.subr.mxu0 0.0
    %2063 = vmatpush1.msra.mxu0 0.0
    %2064 = vmatprep.subr.mxu0 0.0
    %2065 = vmatpush1.msra.mxu0 0.0
    %2066 = vmatprep.subr.mxu0 0.0
    %2067 = vmatpush1.msra.mxu0 0.0
    %2068 = vmatprep.subr.mxu0 0.0
    %2069 = vmatpush1.msra.mxu0 0.0
    %2070 = vmatprep.subr.mxu0 0.0
    %2071 = vmatpush1.msra.mxu0 0.0
    %2072 = vmatprep.subr.mxu0 0.0
    %2073 = vmatpush1.msra.mxu0 0.0
    %2074 = vmatprep.subr.mxu0 0.0
    %2075 = vmatpush1.msra.mxu0 0.0
    %2076 = vmatprep.subr.mxu0 0.0
    %2077 = vmatpush1.msra.mxu0 0.0
    %2078 = vmatprep.subr.mxu0 0.0
    %2079 = vmatpush1.msra.mxu0 0.0
    %2080 = vmatprep.subr.mxu0 %v1864
    %2081 = vmatpush1.msra.mxu0 %v1862
    %2082 = vmatprep.subr.mxu0 0.0
    %2083 = vmatpush2.msra.mxu0 0.0
    %2084 = vmatprep.subr.mxu0 0.0
    %2085 = vmatpush2.msra.mxu0 0.0
    %2086 = vmatprep.subr.mxu0 0.0
    %2087 = vmatpush2.msra.mxu0 0.0
    %2088 = vmatprep.subr.mxu0 0.0
    %2089 = vmatpush2.msra.mxu0 0.0
    %2090 = vmatprep.subr.mxu0 0.0
    %2091 = vmatpush2.msra.mxu0 0.0
    %2092 = vmatprep.subr.mxu0 0.0
    %2093 = vmatpush2.msra.mxu0 0.0
    %2094 = vmatprep.subr.mxu0 0.0
    %2095 = vmatpush2.msra.mxu0 0.0
    %2096 = vmatprep.subr.mxu0 0.0
    %2097 = vmatpush2.msra.mxu0 0.0
    %2098 = vmatprep.subr.mxu0 0.0
    %2099 = vmatpush2.msra.mxu0 0.0
    %2100 = vmatprep.subr.mxu0 0.0
    %2101 = vmatpush2.msra.mxu0 0.0
    %2102 = vmatprep.subr.mxu0 0.0
    %2103 = vmatpush2.msra.mxu0 0.0
    %2104 = vmatprep.subr.mxu0 0.0
    %2105 = vmatpush2.msra.mxu0 0.0
    %2106 = vmatprep.subr.mxu0 0.0
    %2107 = vmatpush2.msra.mxu0 0.0
    %2108 = vmatprep.subr.mxu0 0.0
    %2109 = vmatpush2.msra.mxu0 0.0
    %2110 = vmatprep.subr.mxu0 0.0
    %2111 = vmatpush2.msra.mxu0 0.0
    %2112 = vmatprep.subr.mxu0 0.0
    %2113 = vmatpush2.msra.mxu0 0.0
    %2114 = vmatprep.mubr.f32.mxu0 0.0
    %2115 = vmatmul.mubr.f32.gmra.mxu0 %v1842
    %v2116 = vpop.f32.mrf.mxu0
    %v2117 = vadd.f32 %v1805, %v2116
    %v2118 = vpop.f32.mrf.mxu0
    %v2119 = vadd.f32 %v1809, %v2118
    %2120 = vmatprep.mubr.f32.mxu0 0.0
    %2121 = vmatmul.mubr.f32.gmra.mxu0 %v1845
    %v2122 = vpop.f32.mrf.mxu0
    %v2123 = vadd.f32 %v1805, %v2122
    %v2124 = vpop.f32.mrf.mxu0
    %v2125 = vadd.f32 %v1809, %v2124
    %2126 = vmatprep.mubr.f32.mxu0 0.0
    %2127 = vmatmul.mubr.f32.gmra.mxu0 %v1848
    %v2128 = vpop.f32.mrf.mxu0
    %v2129 = vadd.f32 %v1805, %v2128
    %v2130 = vpop.f32.mrf.mxu0
    %v2131 = vadd.f32 %v1809, %v2130
    %2132 = vmatprep.mubr.f32.mxu0 0.0
    %2133 = vmatmul.mubr.f32.gmra.mxu0 %v1851
    %v2134 = vpop.f32.mrf.mxu0
    %v2135 = vadd.f32 %v1805, %v2134
    %v2136 = vpop.f32.mrf.mxu0
    %v2137 = vadd.f32 %v1809, %v2136
    %2138 = vdwg.mxu0
    %2139 = vmatprep.subr.mxu0 0.0
    %2140 = vmatpush1.msra.mxu0 0.0
    %2141 = vmatprep.subr.mxu0 0.0
    %2142 = vmatpush1.msra.mxu0 0.0
    %2143 = vmatprep.subr.mxu0 0.0
    %2144 = vmatpush1.msra.mxu0 0.0
    %2145 = vmatprep.subr.mxu0 0.0
    %2146 = vmatpush1.msra.mxu0 0.0
    %2147 = vmatprep.subr.mxu0 0.0
    %2148 = vmatpush1.msra.mxu0 0.0
    %2149 = vmatprep.subr.mxu0 0.0
    %2150 = vmatpush1.msra.mxu0 0.0
    %2151 = vmatprep.subr.mxu0 0.0
    %2152 = vmatpush1.msra.mxu0 0.0
    %2153 = vmatprep.subr.mxu0 0.0
    %2154 = vmatpush1.msra.mxu0 0.0
    %2155 = vmatprep.subr.mxu0 0.0
    %2156 = vmatpush1.msra.mxu0 0.0
    %2157 = vmatprep.subr.mxu0 0.0
    %2158 = vmatpush1.msra.mxu0 0.0
    %2159 = vmatprep.subr.mxu0 0.0
    %2160 = vmatpush1.msra.mxu0 0.0
    %2161 = vmatprep.subr.mxu0 0.0
    %2162 = vmatpush1.msra.mxu0 0.0
    %2163 = vmatprep.subr.mxu0 0.0
    %2164 = vmatpush1.msra.mxu0 0.0
    %2165 = vmatprep.subr.mxu0 0.0
    %2166 = vmatpush1.msra.mxu0 0.0
    %2167 = vmatprep.subr.mxu0 0.0
    %2168 = vmatpush1.msra.mxu0 0.0
    %2169 = vmatprep.subr.mxu0 %v1868
    %2170 = vmatpush1.msra.mxu0 %v1866
    %2171 = vmatprep.subr.mxu0 0.0
    %2172 = vmatpush2.msra.mxu0 0.0
    %2173 = vmatprep.subr.mxu0 0.0
    %2174 = vmatpush2.msra.mxu0 0.0
    %2175 = vmatprep.subr.mxu0 0.0
    %2176 = vmatpush2.msra.mxu0 0.0
    %2177 = vmatprep.subr.mxu0 0.0
    %2178 = vmatpush2.msra.mxu0 0.0
    %2179 = vmatprep.subr.mxu0 0.0
    %2180 = vmatpush2.msra.mxu0 0.0
    %2181 = vmatprep.subr.mxu0 0.0
    %2182 = vmatpush2.msra.mxu0 0.0
    %2183 = vmatprep.subr.mxu0 0.0
    %2184 = vmatpush2.msra.mxu0 0.0
    %2185 = vmatprep.subr.mxu0 0.0
    %2186 = vmatpush2.msra.mxu0 0.0
    %2187 = vmatprep.subr.mxu0 0.0
    %2188 = vmatpush2.msra.mxu0 0.0
    %2189 = vmatprep.subr.mxu0 0.0
    %2190 = vmatpush2.msra.mxu0 0.0
    %2191 = vmatprep.subr.mxu0 0.0
    %2192 = vmatpush2.msra.mxu0 0.0
    %2193 = vmatprep.subr.mxu0 0.0
    %2194 = vmatpush2.msra.mxu0 0.0
    %2195 = vmatprep.subr.mxu0 0.0
    %2196 = vmatpush2.msra.mxu0 0.0
    %2197 = vmatprep.subr.mxu0 0.0
    %2198 = vmatpush2.msra.mxu0 0.0
    %2199 = vmatprep.subr.mxu0 0.0
    %2200 = vmatpush2.msra.mxu0 0.0
    %2201 = vmatprep.subr.mxu0 0.0
    %2202 = vmatpush2.msra.mxu0 0.0
    %2203 = vmatprep.mubr.f32.mxu0 0.0
    %2204 = vmatmul.mubr.f32.gmra.mxu0 %v1842
    %v2205 = vpop.f32.mrf.mxu0
    %v2206 = vadd.f32 %v1813, %v2205
    %v2207 = vpop.f32.mrf.mxu0
    %v2208 = vadd.f32 %v1817, %v2207
    %2209 = vmatprep.mubr.f32.mxu0 0.0
    %2210 = vmatmul.mubr.f32.gmra.mxu0 %v1845
    %v2211 = vpop.f32.mrf.mxu0
    %v2212 = vadd.f32 %v1813, %v2211
    %v2213 = vpop.f32.mrf.mxu0
    %v2214 = vadd.f32 %v1817, %v2213
    %2215 = vmatprep.mubr.f32.mxu0 0.0
    %2216 = vmatmul.mubr.f32.gmra.mxu0 %v1848
    %v2217 = vpop.f32.mrf.mxu0
    %v2218 = vadd.f32 %v1813, %v2217
    %v2219 = vpop.f32.mrf.mxu0
    %v2220 = vadd.f32 %v1817, %v2219
    %2221 = vmatprep.mubr.f32.mxu0 0.0
    %2222 = vmatmul.mubr.f32.gmra.mxu0 %v1851
    %v2223 = vpop.f32.mrf.mxu0
    %v2224 = vadd.f32 %v1813, %v2223
    %v2225 = vpop.f32.mrf.mxu0
    %v2226 = vadd.f32 %v1817, %v2225
    %2227 = vdwg.mxu0
    %2228 = vmatprep.subr.mxu0 0.0
    %2229 = vmatpush1.msra.mxu0 0.0
    %2230 = vmatprep.subr.mxu0 0.0
    %2231 = vmatpush1.msra.mxu0 0.0
    %2232 = vmatprep.subr.mxu0 0.0
    %2233 = vmatpush1.msra.mxu0 0.0
    %2234 = vmatprep.subr.mxu0 0.0
    %2235 = vmatpush1.msra.mxu0 0.0
    %2236 = vmatprep.subr.mxu0 0.0
    %2237 = vmatpush1.msra.mxu0 0.0
    %2238 = vmatprep.subr.mxu0 0.0
    %2239 = vmatpush1.msra.mxu0 0.0
    %2240 = vmatprep.subr.mxu0 0.0
    %2241 = vmatpush1.msra.mxu0 0.0
    %2242 = vmatprep.subr.mxu0 0.0
    %2243 = vmatpush1.msra.mxu0 0.0
    %2244 = vmatprep.subr.mxu0 0.0
    %2245 = vmatpush1.msra.mxu0 0.0
    %2246 = vmatprep.subr.mxu0 0.0
    %2247 = vmatpush1.msra.mxu0 0.0
    %2248 = vmatprep.subr.mxu0 0.0
    %2249 = vmatpush1.msra.mxu0 0.0
    %2250 = vmatprep.subr.mxu0 0.0
    %2251 = vmatpush1.msra.mxu0 0.0
    %2252 = vmatprep.subr.mxu0 0.0
    %2253 = vmatpush1.msra.mxu0 0.0
    %2254 = vmatprep.subr.mxu0 0.0
    %2255 = vmatpush1.msra.mxu0 0.0
    %2256 = vmatprep.subr.mxu0 0.0
    %2257 = vmatpush1.msra.mxu0 0.0
    %2258 = vmatprep.subr.mxu0 0.0
    %2259 = vmatpush1.msra.mxu0 %v1870
    %2260 = vmatprep.subr.mxu0 0.0
    %2261 = vmatpush2.msra.mxu0 0.0
    %2262 = vmatprep.subr.mxu0 0.0
    %2263 = vmatpush2.msra.mxu0 0.0
    %2264 = vmatprep.subr.mxu0 0.0
    %2265 = vmatpush2.msra.mxu0 0.0
    %2266 = vmatprep.subr.mxu0 0.0
    %2267 = vmatpush2.msra.mxu0 0.0
    %2268 = vmatprep.subr.mxu0 0.0
    %2269 = vmatpush2.msra.mxu0 0.0
    %2270 = vmatprep.subr.mxu0 0.0
    %2271 = vmatpush2.msra.mxu0 0.0
    %2272 = vmatprep.subr.mxu0 0.0
    %2273 = vmatpush2.msra.mxu0 0.0
    %2274 = vmatprep.subr.mxu0 0.0
    %2275 = vmatpush2.msra.mxu0 0.0
    %2276 = vmatprep.subr.mxu0 0.0
    %2277 = vmatpush2.msra.mxu0 0.0
    %2278 = vmatprep.subr.mxu0 0.0
    %2279 = vmatpush2.msra.mxu0 0.0
    %2280 = vmatprep.subr.mxu0 0.0
    %2281 = vmatpush2.msra.mxu0 0.0
    %2282 = vmatprep.subr.mxu0 0.0
    %2283 = vmatpush2.msra.mxu0 0.0
    %2284 = vmatprep.subr.mxu0 0.0
    %2285 = vmatpush2.msra.mxu0 0.0
    %2286 = vmatprep.subr.mxu0 0.0
    %2287 = vmatpush2.msra.mxu0 0.0
    %2288 = vmatprep.subr.mxu0 0.0
    %2289 = vmatpush2.msra.mxu0 0.0
    %2290 = vmatprep.subr.mxu0 0.0
    %2291 = vmatpush2.msra.mxu0 0.0
    %2292 = vmatprep.mubr.f32.mxu0 0.0
    %2293 = vmatmul.mubr.f32.gmra.mxu0 %v1842
    %v2294 = vpop.f32.mrf.mxu0
    %v2295 = vadd.f32 %v1821, %v2294
    %v2296 = vpop.f32.mrf.mxu0
    %2297 = vmatprep.mubr.f32.mxu0 0.0
    %2298 = vmatmul.mubr.f32.gmra.mxu0 %v1845
    %v2299 = vpop.f32.mrf.mxu0
    %v2300 = vadd.f32 %v1821, %v2299
    %v2301 = vpop.f32.mrf.mxu0
    %2302 = vmatprep.mubr.f32.mxu0 0.0
    %2303 = vmatmul.mubr.f32.gmra.mxu0 %v1848
    %v2304 = vpop.f32.mrf.mxu0
    %v2305 = vadd.f32 %v1821, %v2304
    %v2306 = vpop.f32.mrf.mxu0
    %2307 = vmatprep.mubr.f32.mxu0 0.0
    %2308 = vmatmul.mubr.f32.gmra.mxu0 %v1851
    %v2309 = vpop.f32.mrf.mxu0
    %v2310 = vadd.f32 %v1821, %v2309
    %v2311 = vpop.f32.mrf.mxu0
    %2312 = vdwg.mxu0
    %2313 = vst [vmem:[#allocation2] sm:$0xff] %v1939
    %2314 = vst [vmem:[#allocation2 + $0x8] sm:$0xff] %v1941
    %2315 = vst [vmem:[#allocation2 + $0x10] sm:$0xff] %v2028
    %2316 = vst [vmem:[#allocation2 + $0x18] sm:$0xff] %v2030
    %2317 = vst [vmem:[#allocation2 + $0x20] sm:$0xff] %v2117
    %2318 = vst [vmem:[#allocation2 + $0x28] sm:$0xff] %v2119
    %2319 = vst [vmem:[#allocation2 + $0x30] sm:$0xff] %v2206
    %2320 = vst [vmem:[#allocation2 + $0x38] sm:$0xff] %v2208
    %2321 = vst.msk [vmem:[#allocation2 + $0x40] sm:$0xff] %vm706, %v2295
    %2322 = vst [vmem:[#allocation2 + $0x48] sm:$0xff] %v1945
    %2323 = vst [vmem:[#allocation2 + $0x50] sm:$0xff] %v1947
    %2324 = vst [vmem:[#allocation2 + $0x58] sm:$0xff] %v2034
    %2325 = vst [vmem:[#allocation2 + $0x60] sm:$0xff] %v2036
    %2326 = vst [vmem:[#allocation2 + $0x68] sm:$0xff] %v2123
    %2327 = vst [vmem:[#allocation2 + $0x70] sm:$0xff] %v2125
    %2328 = vst [vmem:[#allocation2 + $0x78] sm:$0xff] %v2212
    %2329 = vst [vmem:[#allocation2 + $0x80] sm:$0xff] %v2214
    %2330 = vst.msk [vmem:[#allocation2 + $0x88] sm:$0xff] %vm706, %v2300
    %2331 = vst [vmem:[#allocation2 + $0x90] sm:$0xff] %v1951
    %2332 = vst [vmem:[#allocation2 + $0x98] sm:$0xff] %v1953
    %2333 = vst [vmem:[#allocation2 + $0xa0] sm:$0xff] %v2040
    %2334 = vst [vmem:[#allocation2 + $0xa8] sm:$0xff] %v2042
    %2335 = vst [vmem:[#allocation2 + $0xb0] sm:$0xff] %v2129
    %2336 = vst [vmem:[#allocation2 + $0xb8] sm:$0xff] %v2131
    %2337 = vst [vmem:[#allocation2 + $0xc0] sm:$0xff] %v2218
    %2338 = vst [vmem:[#allocation2 + $0xc8] sm:$0xff] %v2220
    %2339 = vst.msk [vmem:[#allocation2 + $0xd0] sm:$0xff] %vm706, %v2305
    %2340 = vst [vmem:[#allocation2 + $0xd8] sm:$0xff] %v1957
    %2341 = vst [vmem:[#allocation2 + $0xe0] sm:$0xff] %v1959
    %2342 = vst [vmem:[#allocation2 + $0xe8] sm:$0xff] %v2046
    %2343 = vst [vmem:[#allocation2 + $0xf0] sm:$0xff] %v2048
    %2344 = vst [vmem:[#allocation2 + $0xf8] sm:$0xff] %v2135
    %2345 = vst [vmem:[#allocation2 + $0x100] sm:$0xff] %v2137
    %2346 = vst [vmem:[#allocation2 + $0x108] sm:$0xff] %v2224
    %2347 = vst [vmem:[#allocation2 + $0x110] sm:$0xff] %v2226
    %2348 = vst.msk [vmem:[#allocation2 + $0x118] sm:$0xff] %vm706, %v2310
    // Predicated region
    $region42: #{tpu_custom_call.1} parent=1 // pred_check
      _
    $region43: #{tpu_custom_call.1} parent=1 // pred_check_branch
      %2350 = sbr.rel (0) target = $region45
    $region44: #{tpu_custom_call.1} parent=1 // pred_region
      %s2352 = ssub.s32 4608, 4608
      %2353 = vsyncadd [#allocation3], %s2352
      %s2354 = sshll.u32 [#allocation2], 4
      %s2355 = int_to_ptr.vmem [resolvable:$true] %s2354
      %2360 = dma.vmem_to_hbm [thread:$0]  %s2355, 4608, %s10, [#allocation3], 1152, 1152, 72
    $region45: #{tpu_custom_call.1} parent=1 // pred_fallthru
      _
    // Predicated region
    $region46: #{tpu_custom_call.1} parent=1 // pred_check
      _
    $region47: #{tpu_custom_call.1} parent=1 // pred_check_branch
      %2362 = sbr.rel (0) target = $region49
    $region48: #{tpu_custom_call.1} parent=1 // pred_region
      %2363 = dma.done [#allocation3], 4608
    $region49: #{tpu_custom_call.1} parent=1 // pred_fallthru
      _
    %2364 = vsyncpa [#allocation3], 1

</llo_original>
